<compile_context>
chip_gen: v7x
topology: tpu7x:2x2x1
jax: 0.10.0
libtpu: 0.0.40
codegen_flags: <defaults>
</compile_context>

<pallas_src>
import functools

import jax
import jax.numpy as jnp
import numpy as np
from jax.experimental import pallas as pl
from jax.experimental.pallas import tpu as pltpu

LN_EPS = 1e-5
LANE = 128


def _round_up(x, m):
    return ((x + m - 1) // m) * m


def _mm(a, b):
    """MXU matmul with f32 accumulation; LHS is cast to the weight dtype."""
    return jnp.dot(a.astype(b.dtype), b, preferred_element_type=jnp.float32)


def _layernorm_padded(x, inv_n, n_pad):
    """F.layer_norm over the last dim (biased var, eps=1e-5), two-pass.

    `x` may carry `n_pad` trailing zero-padded lanes; the centered
    sum-of-squares is corrected by n_pad * mu^2 so the statistics are exactly
    those of the real (1/inv_n) columns.
    """
    s1 = jnp.sum(x, axis=-1, keepdims=True)
    mu = s1 * inv_n
    xc = x - mu
    ss = jnp.sum(xc * xc, axis=-1, keepdims=True)
    if n_pad > 0:
        ss = ss - float(n_pad) * (mu * mu)
    var = jnp.maximum(ss * inv_n, 0.0)
    return xc * jax.lax.rsqrt(var + LN_EPS)


def forward_map_kernel(x_ref, w1_ref, w2_ref, wf1_ref, wf2_ref,
                       vh_ref, vh2_ref, bf2_ref, out_ref, *, h_valid: int):
    Hp = vh_ref.shape[-1]
    inv_h = 1.0 / float(h_valid)
    n_pad = Hp - h_valid

    x = x_ref[...]                               # (bt, obs+z+act)

    vh = vh_ref[0]                               # (8, Hp): bz1,gz,bz,bs1,gs,bs,bf1,0
    bz1, gz, bz = vh[0:1], vh[1:2], vh[2:3]
    bs1, gs, bs = vh[3:4], vh[4:5], vh[5:6]
    bf1 = vh[6:7]
    vh2 = vh2_ref[0]                             # (2, H2p): bz2, bs2
    bz2, bs2 = vh2[0:1], vh2[1:2]

    # ---- layer 1, both branches in one MXU contraction -> (bt, 2*Hp) ----
    h12 = _mm(x, w1_ref[0])
    hz = jnp.tanh(_layernorm_padded(h12[:, :Hp] + bz1, inv_h, n_pad) * gz + bz)
    hs = jnp.tanh(_layernorm_padded(h12[:, Hp:] + bs1, inv_h, n_pad) * gs + bs)

    # ---- layer 2 + ReLU ----
    z_emb = jnp.maximum(_mm(hz, w2_ref[0, 0]) + bz2, 0.0)       # (bt, H2p)
    sa_emb = jnp.maximum(_mm(hs, w2_ref[0, 1]) + bs2, 0.0)      # (bt, H2p)

    # ---- Fs: Linear -> ReLU -> Linear (Wf1 pre-split along its K axis) ----
    t = jnp.maximum(
        _mm(sa_emb, wf1_ref[0, 0]) + _mm(z_emb, wf1_ref[0, 1]) + bf1, 0.0)  # (bt, Hp)
    out_ref[0] = _mm(t, wf2_ref[0]) + bf2_ref[0]                            # (bt, out_pad)


def _prepare_params(params, obs_dim, z_dim, action_dim, use_bf16):
    """One-time re-layout: fuse/split/pad weights, pack the small vectors.

    All padding is with zeros, which (together with zero-padded gains/biases
    and the padded-LN correction in the kernel) keeps the math identical to
    the unpadded PyTorch forward.
    """
    wz1, ws1 = params["wz1"], params["ws1"]            # (P, obs+z, H), (P, obs+a, H)
    wz2, ws2 = params["wz2"], params["ws2"]            # (P, H, H/2)
    wf1, wf2 = params["wf1"], params["wf2"]            # (P, H, H), (P, H, out)
    P, _, H = wz1.shape
    half = H // 2
    out_dim = wf2.shape[-1]

    Hp = _round_up(H, LANE)
    H2p = _round_up(half, LANE)
    out_pad = _round_up(out_dim, LANE)

    def padlast(a, target):
        return jnp.pad(a, [(0, 0)] * (a.ndim - 1) + [(0, target - a.shape[-1])])

    def pad2(a, rows, cols):
        return jnp.pad(a, ((0, 0), (0, rows - a.shape[1]), (0, cols - a.shape[2])))

    # Fused layer-1 weight: rows ordered [obs | z | act], cols [hz(Hp) | hs(Hp)].
    wz1_p = padlast(wz1, Hp)                                        # (P, obs+z, Hp)
    ws1_p = padlast(ws1, Hp)                                        # (P, obs+a, Hp)
    zeros_a = jnp.zeros((P, action_dim, Hp), wz1.dtype)
    zeros_z = jnp.zeros((P, z_dim, Hp), ws1.dtype)
    left = jnp.concatenate([wz1_p, zeros_a], axis=1)                # (P, Din, Hp)
    right = jnp.concatenate([ws1_p[:, :obs_dim], zeros_z, ws1_p[:, obs_dim:]], axis=1)
    w1 = jnp.concatenate([left, right], axis=-1)                    # (P, Din, 2*Hp)

    w2 = jnp.stack([pad2(wz2, Hp, H2p), pad2(ws2, Hp, H2p)], axis=1)         # (P,2,Hp,H2p)
    wf1_s = jnp.stack([pad2(wf1[:, :half, :], H2p, Hp),
                       pad2(wf1[:, half:, :], H2p, Hp)], axis=1)             # (P,2,H2p,Hp)
    wf2_p = pad2(wf2, Hp, out_pad)                                           # (P,Hp,out_pad)

    if use_bf16:  # store weights as bf16 in HBM -> halves weight DMA + VMEM residency
        w1, w2, wf1_s, wf2_p = (a.astype(jnp.bfloat16) for a in (w1, w2, wf1_s, wf2_p))

    # Packed small vectors (stay f32; used by VPU/EUP math).
    def pv(name):
        return padlast(params[name], Hp)                            # (P,1,Hp)

    vh = jnp.concatenate([pv("bz1"), pv("gz"), pv("bz"),
                          pv("bs1"), pv("gs"), pv("bs"),
                          pv("bf1"), jnp.zeros((P, 1, Hp), jnp.float32)], axis=1)  # (P,8,Hp)
    vh2 = jnp.concatenate([padlast(params["bz2"], H2p),
                           padlast(params["bs2"], H2p)], axis=1)                    # (P,2,H2p)
    bf2 = padlast(params["bf2"], out_pad)                                           # (P,1,out_pad)

    return w1, w2, wf1_s, wf2_p, vh, vh2, bf2, (H, Hp, H2p, out_dim, out_pad)


def forward_map(obs, z, action, params, num_parallel, *,
                use_bf16=False, batch_block=None):
    B, obs_dim = obs.shape
    z_dim, action_dim = z.shape[1], action.shape[1]

    x_in = jnp.concatenate([obs, z, action], axis=-1)               # (B, Din)
    Din = x_in.shape[-1]

    (w1, w2, wf1, wf2, vh, vh2, bf2,
     (H, Hp, H2p, out_dim, out_pad)) = _prepare_params(
        params, obs_dim, z_dim, action_dim, use_bf16)

    # Batch tiling: P outer / batch inner so each member's weights are DMA'd
    # once and reused across batch tiles (index_maps ignore the batch axis).
    if batch_block is None or batch_block >= B:
        bt = B
    else:
        assert B % batch_block == 0 and batch_block % 8 == 0, \
            "batch_block must divide B and be a multiple of 8"
        bt = batch_block
    nbt = B // bt
    grid = (num_parallel, nbt)

    in_specs = [
        pl.BlockSpec((bt, Din), lambda p, b: (b, 0)),                  # x_in
        pl.BlockSpec((1, Din, 2 * Hp), lambda p, b: (p, 0, 0)),        # w1 (fused)
        pl.BlockSpec((1, 2, Hp, H2p), lambda p, b: (p, 0, 0, 0)),      # w2 stacked
        pl.BlockSpec((1, 2, H2p, Hp), lambda p, b: (p, 0, 0, 0)),      # wf1 split
        pl.BlockSpec((1, Hp, out_pad), lambda p, b: (p, 0, 0)),        # wf2
        pl.BlockSpec((1, 8, Hp), lambda p, b: (p, 0, 0)),              # packed H vectors
        pl.BlockSpec((1, 2, H2p), lambda p, b: (p, 0, 0)),             # packed H/2 vectors
        pl.BlockSpec((1, 1, out_pad), lambda p, b: (p, 0, 0)),         # bf2
    ]
    out_spec = pl.BlockSpec((1, bt, out_pad), lambda p, b: (p, b, 0))

    # --- VMEM budget: double-buffered per-step blocks + f32 intermediates ---
    wb = 2 if use_bf16 else 4
    block_bytes = (bt * Din * 4
                   + Din * 2 * Hp * wb
                   + 2 * Hp * H2p * wb
                   + 2 * H2p * Hp * wb
                   + Hp * out_pad * wb
                   + (8 * Hp + 2 * H2p + out_pad) * 4
                   + bt * out_pad * 4)
    interm_bytes = bt * (2 * Hp + 2 * Hp + 2 * H2p + Hp) * 4
    vmem_limit = 2 * block_bytes + 2 * interm_bytes + (4 << 20)
    try:   # clamp to this generation's VMEM (v7x: 64 MiB/TC vs 128 MiB on v5e/v6e)
        vmem_cap = int(getattr(pltpu.get_tpu_info(), "vmem_capacity_bytes", 64 << 20))
    except Exception:
        vmem_cap = 64 << 20
    vmem_limit = max(32 << 20, min(int(vmem_limit), int(vmem_cap * 0.75)))

    out = pl.pallas_call(
        functools.partial(forward_map_kernel, h_valid=H),
        out_shape=jax.ShapeDtypeStruct((num_parallel, B, out_pad), jnp.float32),
        grid=grid,
        in_specs=in_specs,
        out_specs=out_spec,
        compiler_params=pltpu.CompilerParams(
            dimension_semantics=("parallel", "arbitrary"),
            vmem_limit_bytes=vmem_limit),
    )(x_in, w1, w2, wf1, wf2, vh, vh2, bf2)

    return out[..., :out_dim]


def init_params(key, obs_dim, z_dim, action_dim, hidden_dim, num_parallel):
    """Deterministic kaiming-uniform-ish init mirroring DenseParallel.reset_parameters."""
    P, H = num_parallel, hidden_dim

    def lin(k, fan_in, fan_out):
        kw, kb = jax.random.split(k)
        bound_w = np.sqrt(6.0 / fan_in)
        bound_b = 1.0 / np.sqrt(fan_in)
        w = jax.random.uniform(kw, (P, fan_in, fan_out), jnp.float32, -bound_w, bound_w)
        b = jax.random.uniform(kb, (P, 1, fan_out), jnp.float32, -bound_b, bound_b)
        return w, b

    keys = jax.random.split(key, 6)
    wz1, bz1 = lin(keys[0], obs_dim + z_dim, H)
    wz2, bz2 = lin(keys[1], H, H // 2)
    ws1, bs1 = lin(keys[2], obs_dim + action_dim, H)
    ws2, bs2 = lin(keys[3], H, H // 2)
    wf1, bf1 = lin(keys[4], H, H)
    wf2, bf2 = lin(keys[5], H, z_dim)

    return dict(
        wz1=wz1, bz1=bz1, gz=jnp.ones((P, 1, H), jnp.float32), bz=jnp.zeros((P, 1, H), jnp.float32),
        wz2=wz2, bz2=bz2,
        ws1=ws1, bs1=bs1, gs=jnp.ones((P, 1, H), jnp.float32), bs=jnp.zeros((P, 1, H), jnp.float32),
        ws2=ws2, bs2=bs2,
        wf1=wf1, bf1=bf1, wf2=wf2, bf2=bf2,
    )


def forward_map_ref(obs, z, action, p, num_parallel):
    """Pure-JAX reference matching the PyTorch forward."""
    obs_e = jnp.broadcast_to(obs, (num_parallel,) + obs.shape)
    z_e = jnp.broadcast_to(z, (num_parallel,) + z.shape)
    a_e = jnp.broadcast_to(action, (num_parallel,) + action.shape)

    def ln(x):
        mu = jnp.mean(x, -1, keepdims=True)
        var = jnp.mean((x - mu) ** 2, -1, keepdims=True)
        return (x - mu) / jnp.sqrt(var + LN_EPS)

    hz = jnp.einsum("pbi,pio->pbo", jnp.concatenate([obs_e, z_e], -1), p["wz1"]) + p["bz1"]
    hz = jnp.tanh(ln(hz) * p["gz"] + p["bz"])
    ze = jax.nn.relu(jnp.einsum("pbi,pio->pbo", hz, p["wz2"]) + p["bz2"])

    hs = jnp.einsum("pbi,pio->pbo", jnp.concatenate([obs_e, a_e], -1), p["ws1"]) + p["bs1"]
    hs = jnp.tanh(ln(hs) * p["gs"] + p["bs"])
    se = jax.nn.relu(jnp.einsum("pbi,pio->pbo", hs, p["ws2"]) + p["bs2"])

    x = jnp.concatenate([se, ze], -1)
    x = jax.nn.relu(jnp.einsum("pbi,pio->pbo", x, p["wf1"]) + p["bf1"])
    return jnp.einsum("pbi,pio->pbo", x, p["wf2"]) + p["bf2"]


if __name__ == "__main__":
    obs_dim, z_dim, action_dim, hidden_dim = 16, 8, 4, 32
    num_parallel, batch = 2, 16

    key = jax.random.PRNGKey(0)
    k_obs, k_z, k_act, k_par = jax.random.split(key, 4)
    obs = jax.random.normal(k_obs, (batch, obs_dim), jnp.float32)
    z = jax.random.normal(k_z, (batch, z_dim), jnp.float32)
    action = jax.random.normal(k_act, (batch, action_dim), jnp.float32)

    params = init_params(k_par, obs_dim, z_dim, action_dim, hidden_dim, num_parallel)
    ref = forward_map_ref(obs, z, action, params, num_parallel)

    # f32, whole batch as one tile (exact parity with PyTorch math).
    out = jax.block_until_ready(forward_map(obs, z, action, params, num_parallel))
    assert out.shape == (num_parallel, batch, z_dim)
    np.testing.assert_allclose(np.asarray(out), np.asarray(ref), rtol=1e-4, atol=1e-4)

    # f32, batch-tiled grid (weights fetched once per member, reused across tiles).
    out_t = jax.block_until_ready(
        forward_map(obs, z, action, params, num_parallel, batch_block=8))
    np.testing.assert_allclose(np.asarray(out_t), np.asarray(ref), rtol=1e-4, atol=1e-4)

    # bf16 weights / matmul inputs in HBM, f32 accumulation + f32 LN/tanh.
    out_bf = jax.block_until_ready(
        forward_map(obs, z, action, params, num_parallel, use_bf16=True))
    np.testing.assert_allclose(np.asarray(out_bf), np.asarray(ref), rtol=1.5e-1, atol=1.5e-1)

    print("KERNEL_OK")
</pallas_src>

<mosaic_0001>
module attributes {stable_mosaic.version = 11 : i64} {
  func.func @forward_map_kernel(%arg0: i32, %arg1: i32, %arg2: memref<16x28xf32, #tpu.memory_space<vmem>>, %arg3: memref<1x28x256xf32, #tpu.memory_space<vmem>>, %arg4: memref<1x2x128x128xf32, #tpu.memory_space<vmem>>, %arg5: memref<1x2x128x128xf32, #tpu.memory_space<vmem>>, %arg6: memref<1x128x128xf32, #tpu.memory_space<vmem>>, %arg7: memref<1x8x128xf32, #tpu.memory_space<vmem>>, %arg8: memref<1x2x128xf32, #tpu.memory_space<vmem>>, %arg9: memref<1x1x128xf32, #tpu.memory_space<vmem>>, %arg10: memref<1x16x128xf32, #tpu.memory_space<vmem>>) attributes {dimension_semantics = [#tpu.dimension_semantics<parallel>, #tpu.dimension_semantics<arbitrary>], iteration_bounds = array<i64: 2, 1>, scalar_prefetch = 0 : i64, scratch_operands = 0 : i64, tpu.core_type = #tpu.core_type<tc>, window_params = [{transform_indices = @transform_0, window_bounds = array<i64: 16, 28>}, {transform_indices = @transform_1, window_bounds = array<i64: 1, 28, 256>}, {transform_indices = @transform_2, window_bounds = array<i64: 1, 2, 128, 128>}, {transform_indices = @transform_3, window_bounds = array<i64: 1, 2, 128, 128>}, {transform_indices = @transform_4, window_bounds = array<i64: 1, 128, 128>}, {transform_indices = @transform_5, window_bounds = array<i64: 1, 8, 128>}, {transform_indices = @transform_6, window_bounds = array<i64: 1, 2, 128>}, {transform_indices = @transform_7, window_bounds = array<i64: 1, 1, 128>}, {transform_indices = @transform_8, window_bounds = array<i64: 1, 16, 128>}]} {
    %c0 = arith.constant 0 : index
    %c0_0 = arith.constant 0 : index
    %0 = vector.load %arg2[%c0, %c0_0] : memref<16x28xf32, #tpu.memory_space<vmem>>, vector<16x28xf32>
    %c0_1 = arith.constant 0 : index
    %c0_2 = arith.constant 0 : index
    %c0_3 = arith.constant 0 : index
    %1 = vector.load %arg7[%c0_1, %c0_2, %c0_3] : memref<1x8x128xf32, #tpu.memory_space<vmem>>, vector<1x8x128xf32>
    %2 = vector.shape_cast %1 : vector<1x8x128xf32> to vector<8x128xf32>
    %3 = vector.extract_strided_slice %2 {offsets = [0, 0], sizes = [1, 128], strides = [1, 1]} : vector<8x128xf32> to vector<1x128xf32>
    %4 = vector.extract_strided_slice %2 {offsets = [1, 0], sizes = [1, 128], strides = [1, 1]} : vector<8x128xf32> to vector<1x128xf32>
    %5 = vector.extract_strided_slice %2 {offsets = [2, 0], sizes = [1, 128], strides = [1, 1]} : vector<8x128xf32> to vector<1x128xf32>
    %6 = vector.extract_strided_slice %2 {offsets = [3, 0], sizes = [1, 128], strides = [1, 1]} : vector<8x128xf32> to vector<1x128xf32>
    %7 = vector.extract_strided_slice %2 {offsets = [4, 0], sizes = [1, 128], strides = [1, 1]} : vector<8x128xf32> to vector<1x128xf32>
    %8 = vector.extract_strided_slice %2 {offsets = [5, 0], sizes = [1, 128], strides = [1, 1]} : vector<8x128xf32> to vector<1x128xf32>
    %9 = vector.extract_strided_slice %2 {offsets = [6, 0], sizes = [1, 128], strides = [1, 1]} : vector<8x128xf32> to vector<1x128xf32>
    %c0_4 = arith.constant 0 : index
    %c0_5 = arith.constant 0 : index
    %c0_6 = arith.constant 0 : index
    %10 = vector.load %arg8[%c0_4, %c0_5, %c0_6] : memref<1x2x128xf32, #tpu.memory_space<vmem>>, vector<1x2x128xf32>
    %11 = vector.shape_cast %10 : vector<1x2x128xf32> to vector<2x128xf32>
    %12 = vector.extract_strided_slice %11 {offsets = [0, 0], sizes = [1, 128], strides = [1, 1]} : vector<2x128xf32> to vector<1x128xf32>
    %13 = vector.extract_strided_slice %11 {offsets = [1, 0], sizes = [1, 128], strides = [1, 1]} : vector<2x128xf32> to vector<1x128xf32>
    %c0_7 = arith.constant 0 : index
    %c0_8 = arith.constant 0 : index
    %c0_9 = arith.constant 0 : index
    %14 = vector.load %arg3[%c0_7, %c0_8, %c0_9] : memref<1x28x256xf32, #tpu.memory_space<vmem>>, vector<1x28x256xf32>
    %15 = vector.shape_cast %14 : vector<1x28x256xf32> to vector<28x256xf32>
    %cst = arith.constant dense<0.000000e+00> : vector<16x256xf32>
    %16 = tpu.matmul %0, %15, %cst {dimension_numbers = #tpu.dot_dimension_numbers<[1], [0], [0], [1], [0, 0, 1, 1], [], []>} : vector<16x28xf32>, vector<28x256xf32>, vector<16x256xf32> -> vector<16x256xf32>
    %17 = vector.extract_strided_slice %16 {offsets = [0, 0], sizes = [16, 128], strides = [1, 1]} : vector<16x256xf32> to vector<16x128xf32>
    %18 = vector.broadcast %3 : vector<1x128xf32> to vector<16x128xf32>
    %19 = arith.addf %17, %18 : vector<16x128xf32>
    %cst_10 = arith.constant dense<0.000000e+00> : vector<16xf32>
    %20 = vector.multi_reduction <add>, %19, %cst_10 [1] : vector<16x128xf32> to vector<16xf32>
    %21 = vector.shape_cast %20 : vector<16xf32> to vector<16x1xf32>
    %cst_11 = arith.constant 3.125000e-02 : f32
    %22 = vector.broadcast %cst_11 : f32 to vector<16x1xf32>
    %23 = arith.mulf %21, %22 : vector<16x1xf32>
    %24 = vector.broadcast %23 : vector<16x1xf32> to vector<16x128xf32>
    %25 = arith.subf %19, %24 : vector<16x128xf32>
    %26 = arith.mulf %25, %25 : vector<16x128xf32>
    %cst_12 = arith.constant dense<0.000000e+00> : vector<16xf32>
    %27 = vector.multi_reduction <add>, %26, %cst_12 [1] : vector<16x128xf32> to vector<16xf32>
    %28 = vector.shape_cast %27 : vector<16xf32> to vector<16x1xf32>
    %29 = arith.mulf %23, %23 : vector<16x1xf32>
    %cst_13 = arith.constant 9.600000e+01 : f32
    %30 = vector.broadcast %cst_13 : f32 to vector<16x1xf32>
    %31 = arith.mulf %30, %29 : vector<16x1xf32>
    %32 = arith.subf %28, %31 : vector<16x1xf32>
    %cst_14 = arith.constant 3.125000e-02 : f32
    %33 = vector.broadcast %cst_14 : f32 to vector<16x1xf32>
    %34 = arith.mulf %32, %33 : vector<16x1xf32>
    %cst_15 = arith.constant 0.000000e+00 : f32
    %35 = vector.broadcast %cst_15 : f32 to vector<16x1xf32>
    %36 = arith.maximumf %34, %35 : vector<16x1xf32>
    %cst_16 = arith.constant 9.99999974E-6 : f32
    %37 = vector.broadcast %cst_16 : f32 to vector<16x1xf32>
    %38 = arith.addf %36, %37 : vector<16x1xf32>
    %39 = math.rsqrt %38 : vector<16x1xf32>
    %40 = vector.broadcast %39 : vector<16x1xf32> to vector<16x128xf32>
    %41 = arith.mulf %25, %40 : vector<16x128xf32>
    %42 = vector.broadcast %4 : vector<1x128xf32> to vector<16x128xf32>
    %43 = arith.mulf %41, %42 : vector<16x128xf32>
    %44 = vector.broadcast %5 : vector<1x128xf32> to vector<16x128xf32>
    %45 = arith.addf %43, %44 : vector<16x128xf32>
    %46 = math.tanh %45 : vector<16x128xf32>
    %47 = vector.extract_strided_slice %16 {offsets = [0, 128], sizes = [16, 128], strides = [1, 1]} : vector<16x256xf32> to vector<16x128xf32>
    %48 = vector.broadcast %6 : vector<1x128xf32> to vector<16x128xf32>
    %49 = arith.addf %47, %48 : vector<16x128xf32>
    %cst_17 = arith.constant dense<0.000000e+00> : vector<16xf32>
    %50 = vector.multi_reduction <add>, %49, %cst_17 [1] : vector<16x128xf32> to vector<16xf32>
    %51 = vector.shape_cast %50 : vector<16xf32> to vector<16x1xf32>
    %cst_18 = arith.constant 3.125000e-02 : f32
    %52 = vector.broadcast %cst_18 : f32 to vector<16x1xf32>
    %53 = arith.mulf %51, %52 : vector<16x1xf32>
    %54 = vector.broadcast %53 : vector<16x1xf32> to vector<16x128xf32>
    %55 = arith.subf %49, %54 : vector<16x128xf32>
    %56 = arith.mulf %55, %55 : vector<16x128xf32>
    %cst_19 = arith.constant dense<0.000000e+00> : vector<16xf32>
    %57 = vector.multi_reduction <add>, %56, %cst_19 [1] : vector<16x128xf32> to vector<16xf32>
    %58 = vector.shape_cast %57 : vector<16xf32> to vector<16x1xf32>
    %59 = arith.mulf %53, %53 : vector<16x1xf32>
    %cst_20 = arith.constant 9.600000e+01 : f32
    %60 = vector.broadcast %cst_20 : f32 to vector<16x1xf32>
    %61 = arith.mulf %60, %59 : vector<16x1xf32>
    %62 = arith.subf %58, %61 : vector<16x1xf32>
    %cst_21 = arith.constant 3.125000e-02 : f32
    %63 = vector.broadcast %cst_21 : f32 to vector<16x1xf32>
    %64 = arith.mulf %62, %63 : vector<16x1xf32>
    %cst_22 = arith.constant 0.000000e+00 : f32
    %65 = vector.broadcast %cst_22 : f32 to vector<16x1xf32>
    %66 = arith.maximumf %64, %65 : vector<16x1xf32>
    %cst_23 = arith.constant 9.99999974E-6 : f32
    %67 = vector.broadcast %cst_23 : f32 to vector<16x1xf32>
    %68 = arith.addf %66, %67 : vector<16x1xf32>
    %69 = math.rsqrt %68 : vector<16x1xf32>
    %70 = vector.broadcast %69 : vector<16x1xf32> to vector<16x128xf32>
    %71 = arith.mulf %55, %70 : vector<16x128xf32>
    %72 = vector.broadcast %7 : vector<1x128xf32> to vector<16x128xf32>
    %73 = arith.mulf %71, %72 : vector<16x128xf32>
    %74 = vector.broadcast %8 : vector<1x128xf32> to vector<16x128xf32>
    %75 = arith.addf %73, %74 : vector<16x128xf32>
    %76 = math.tanh %75 : vector<16x128xf32>
    %c0_24 = arith.constant 0 : index
    %c0_25 = arith.constant 0 : index
    %c0_26 = arith.constant 0 : index
    %c0_27 = arith.constant 0 : index
    %77 = vector.load %arg4[%c0_24, %c0_25, %c0_26, %c0_27] : memref<1x2x128x128xf32, #tpu.memory_space<vmem>>, vector<1x1x128x128xf32>
    %78 = vector.shape_cast %77 : vector<1x1x128x128xf32> to vector<128x128xf32>
    %cst_28 = arith.constant dense<0.000000e+00> : vector<16x128xf32>
    %79 = tpu.matmul %46, %78, %cst_28 {dimension_numbers = #tpu.dot_dimension_numbers<[1], [0], [0], [1], [0, 0, 1, 1], [], []>} : vector<16x128xf32>, vector<128x128xf32>, vector<16x128xf32> -> vector<16x128xf32>
    %80 = vector.broadcast %12 : vector<1x128xf32> to vector<16x128xf32>
    %81 = arith.addf %79, %80 : vector<16x128xf32>
    %cst_29 = arith.constant 0.000000e+00 : f32
    %82 = vector.broadcast %cst_29 : f32 to vector<16x128xf32>
    %83 = arith.maximumf %81, %82 : vector<16x128xf32>
    %c0_30 = arith.constant 0 : index
    %c1 = arith.constant 1 : index
    %c0_31 = arith.constant 0 : index
    %c0_32 = arith.constant 0 : index
    %84 = vector.load %arg4[%c0_30, %c1, %c0_31, %c0_32] : memref<1x2x128x128xf32, #tpu.memory_space<vmem>>, vector<1x1x128x128xf32>
    %85 = vector.shape_cast %84 : vector<1x1x128x128xf32> to vector<128x128xf32>
    %cst_33 = arith.constant dense<0.000000e+00> : vector<16x128xf32>
    %86 = tpu.matmul %76, %85, %cst_33 {dimension_numbers = #tpu.dot_dimension_numbers<[1], [0], [0], [1], [0, 0, 1, 1], [], []>} : vector<16x128xf32>, vector<128x128xf32>, vector<16x128xf32> -> vector<16x128xf32>
    %87 = vector.broadcast %13 : vector<1x128xf32> to vector<16x128xf32>
    %88 = arith.addf %86, %87 : vector<16x128xf32>
    %cst_34 = arith.constant 0.000000e+00 : f32
    %89 = vector.broadcast %cst_34 : f32 to vector<16x128xf32>
    %90 = arith.maximumf %88, %89 : vector<16x128xf32>
    %c0_35 = arith.constant 0 : index
    %c0_36 = arith.constant 0 : index
    %c0_37 = arith.constant 0 : index
    %c0_38 = arith.constant 0 : index
    %91 = vector.load %arg5[%c0_35, %c0_36, %c0_37, %c0_38] : memref<1x2x128x128xf32, #tpu.memory_space<vmem>>, vector<1x1x128x128xf32>
    %92 = vector.shape_cast %91 : vector<1x1x128x128xf32> to vector<128x128xf32>
    %cst_39 = arith.constant dense<0.000000e+00> : vector<16x128xf32>
    %93 = tpu.matmul %90, %92, %cst_39 {dimension_numbers = #tpu.dot_dimension_numbers<[1], [0], [0], [1], [0, 0, 1, 1], [], []>} : vector<16x128xf32>, vector<128x128xf32>, vector<16x128xf32> -> vector<16x128xf32>
    %c0_40 = arith.constant 0 : index
    %c1_41 = arith.constant 1 : index
    %c0_42 = arith.constant 0 : index
    %c0_43 = arith.constant 0 : index
    %94 = vector.load %arg5[%c0_40, %c1_41, %c0_42, %c0_43] : memref<1x2x128x128xf32, #tpu.memory_space<vmem>>, vector<1x1x128x128xf32>
    %95 = vector.shape_cast %94 : vector<1x1x128x128xf32> to vector<128x128xf32>
    %cst_44 = arith.constant dense<0.000000e+00> : vector<16x128xf32>
    %96 = tpu.matmul %83, %95, %cst_44 {dimension_numbers = #tpu.dot_dimension_numbers<[1], [0], [0], [1], [0, 0, 1, 1], [], []>} : vector<16x128xf32>, vector<128x128xf32>, vector<16x128xf32> -> vector<16x128xf32>
    %97 = arith.addf %93, %96 : vector<16x128xf32>
    %98 = vector.broadcast %9 : vector<1x128xf32> to vector<16x128xf32>
    %99 = arith.addf %97, %98 : vector<16x128xf32>
    %cst_45 = arith.constant 0.000000e+00 : f32
    %100 = vector.broadcast %cst_45 : f32 to vector<16x128xf32>
    %101 = arith.maximumf %99, %100 : vector<16x128xf32>
    %c0_46 = arith.constant 0 : index
    %c0_47 = arith.constant 0 : index
    %c0_48 = arith.constant 0 : index
    %102 = vector.load %arg6[%c0_46, %c0_47, %c0_48] : memref<1x128x128xf32, #tpu.memory_space<vmem>>, vector<1x128x128xf32>
    %103 = vector.shape_cast %102 : vector<1x128x128xf32> to vector<128x128xf32>
    %cst_49 = arith.constant dense<0.000000e+00> : vector<16x128xf32>
    %104 = tpu.matmul %101, %103, %cst_49 {dimension_numbers = #tpu.dot_dimension_numbers<[1], [0], [0], [1], [0, 0, 1, 1], [], []>} : vector<16x128xf32>, vector<128x128xf32>, vector<16x128xf32> -> vector<16x128xf32>
    %c0_50 = arith.constant 0 : index
    %c0_51 = arith.constant 0 : index
    %c0_52 = arith.constant 0 : index
    %105 = vector.load %arg9[%c0_50, %c0_51, %c0_52] : memref<1x1x128xf32, #tpu.memory_space<vmem>>, vector<1x1x128xf32>
    %106 = vector.shape_cast %105 : vector<1x1x128xf32> to vector<1x128xf32>
    %107 = vector.broadcast %106 : vector<1x128xf32> to vector<16x128xf32>
    %108 = arith.addf %104, %107 : vector<16x128xf32>
    %c0_53 = arith.constant 0 : index
    %c0_54 = arith.constant 0 : index
    %c0_55 = arith.constant 0 : index
    %109 = vector.load %arg10[%c0_53, %c0_54, %c0_55] : memref<1x16x128xf32, #tpu.memory_space<vmem>>, vector<1x16x128xf32>
    %110 = vector.shape_cast %109 : vector<1x16x128xf32> to vector<16x128xf32>
    %111 = vector.shape_cast %108 : vector<16x128xf32> to vector<1x16x128xf32>
    tpu.vector_store %arg10[%c0_53, %c0_54, %c0_55], %111 {strides = array<i32>} : memref<1x16x128xf32, #tpu.memory_space<vmem>>, vector<1x16x128xf32>,
    return
  }
  func.func @transform_0(%arg0: i32, %arg1: i32) -> (i32, i32) {
    %c0_i32 = arith.constant 0 : i32
    %c0_i32_0 = arith.constant 0 : i32
    return %arg1, %c0_i32 : i32, i32
  }
  func.func @transform_1(%arg0: i32, %arg1: i32) -> (i32, i32, i32) {
    %c0_i32 = arith.constant 0 : i32
    %c0_i32_0 = arith.constant 0 : i32
    %c0_i32_1 = arith.constant 0 : i32
    return %arg0, %c0_i32, %c0_i32_0 : i32, i32, i32
  }
  func.func @transform_2(%arg0: i32, %arg1: i32) -> (i32, i32, i32, i32) {
    %c0_i32 = arith.constant 0 : i32
    %c0_i32_0 = arith.constant 0 : i32
    %c0_i32_1 = arith.constant 0 : i32
    %c0_i32_2 = arith.constant 0 : i32
    return %arg0, %c0_i32, %c0_i32_0, %c0_i32_1 : i32, i32, i32, i32
  }
  func.func @transform_3(%arg0: i32, %arg1: i32) -> (i32, i32, i32, i32) {
    %c0_i32 = arith.constant 0 : i32
    %c0_i32_0 = arith.constant 0 : i32
    %c0_i32_1 = arith.constant 0 : i32
    %c0_i32_2 = arith.constant 0 : i32
    return %arg0, %c0_i32, %c0_i32_0, %c0_i32_1 : i32, i32, i32, i32
  }
  func.func @transform_4(%arg0: i32, %arg1: i32) -> (i32, i32, i32) {
    %c0_i32 = arith.constant 0 : i32
    %c0_i32_0 = arith.constant 0 : i32
    %c0_i32_1 = arith.constant 0 : i32
    return %arg0, %c0_i32, %c0_i32_0 : i32, i32, i32
  }
  func.func @transform_5(%arg0: i32, %arg1: i32) -> (i32, i32, i32) {
    %c0_i32 = arith.constant 0 : i32
    %c0_i32_0 = arith.constant 0 : i32
    %c0_i32_1 = arith.constant 0 : i32
    return %arg0, %c0_i32, %c0_i32_0 : i32, i32, i32
  }
  func.func @transform_6(%arg0: i32, %arg1: i32) -> (i32, i32, i32) {
    %c0_i32 = arith.constant 0 : i32
    %c0_i32_0 = arith.constant 0 : i32
    %c0_i32_1 = arith.constant 0 : i32
    return %arg0, %c0_i32, %c0_i32_0 : i32, i32, i32
  }
  func.func @transform_7(%arg0: i32, %arg1: i32) -> (i32, i32, i32) {
    %c0_i32 = arith.constant 0 : i32
    %c0_i32_0 = arith.constant 0 : i32
    %c0_i32_1 = arith.constant 0 : i32
    return %arg0, %c0_i32, %c0_i32_0 : i32, i32, i32
  }
  func.func @transform_8(%arg0: i32, %arg1: i32) -> (i32, i32, i32) {
    %c0_i32 = arith.constant 0 : i32
    %c0_i32_0 = arith.constant 0 : i32
    return %arg0, %arg1, %c0_i32 : i32, i32, i32
  }
}

</mosaic_0001>

<llo_original>
// kernel: tpu_custom_call.1
$region0: #{tpu_custom_call.1}
  #allocation0 [shape = 'u32[]', space=smem, size = 0x4, offset = 0x4, fixed_abs, tag = 'smem constant byte address 0x4 - core index']
  #allocation1 [shape = 'u32[144,128]{1,0:T(1,128)}', space=vmem, size = 0x12000, scoped, tag = 'internal scratch']
  %s0 = inlined_call_operand.vmem [shape: f32[16,28], index: 0, kind: input, shape index: {}]
  %s1 = inlined_call_operand.vmem [shape: f32[2,28,256], index: 1, kind: input, shape index: {}]
  %s2 = inlined_call_operand.hbm [shape: f32[2,2,128,128], index: 2, kind: input, shape index: {}]
  %s3 = inlined_call_operand.hbm [shape: f32[2,2,128,128], index: 3, kind: input, shape index: {}]
  %s4 = inlined_call_operand.hbm [shape: f32[2,128,128], index: 4, kind: input, shape index: {}]
  %s5 = inlined_call_operand.vmem [shape: f32[2,8,128], index: 5, kind: input, shape index: {}]
  %s6 = inlined_call_operand.vmem [shape: f32[2,2,128], index: 6, kind: input, shape index: {}]
  %s7 = inlined_call_operand.vmem [shape: f32[2,1,128], index: 7, kind: input, shape index: {}]
  %s8 = inlined_call_operand.hbm [shape: f32[2,16,128], index: 8, kind: output, shape index: {}]
  %s9 = sld [smem:[#allocation0]]
  $region77: #{tpu_custom_call.1} parent=0
    _
  %s11 = ssub.s32 1, %s9
  %s12 = scalar_select 0, %s11, %s9
  $region1: #{tpu_custom_call.1} parent=0
    #allocation2 [shape = 'u8[262144]{0}', space=vmem, size = 0x40000, scoped, tag = 'input window, operand 2']
    #allocation3 [shape = 's32[2]{0}', space=sflag, size = 0x8, scoped, tag = 'scoped memory for tpu_custom_call.1']
    #allocation4 [shape = 's32[2]{0}', space=sflag, size = 0x8, scoped, tag = 'scoped memory for tpu_custom_call.1']
    #allocation5 [shape = 'u8[262144]{0}', space=vmem, size = 0x40000, scoped, tag = 'input window, operand 3']
    #allocation6 [shape = 's32[2]{0}', space=sflag, size = 0x8, scoped, tag = 'scoped memory for tpu_custom_call.1']
    #allocation7 [shape = 'u8[131072]{0}', space=vmem, size = 0x20000, scoped, tag = 'input window, operand 4']
    #allocation8 [shape = 'u8[16384]{0}', space=vmem, size = 0x4000, scoped, tag = 'output window, operand 0']
    %13 = vsyncpa [#allocation3], 0
    %s14 = scalar_lea.sflag [#allocation3], 1
    %15 = vsyncpa %s14, 0
    %16 = vsyncpa [#allocation6], 0
    %s17 = scalar_lea.sflag [#allocation6], 1
    %18 = vsyncpa %s17, 0
    %19 = vsyncpa [#allocation4], 0
    %s20 = scalar_lea.sflag [#allocation4], 1
    %21 = vsyncpa %s20, 0
    loop: start=0, step=1, limit=4
    $region2: #{tpu_custom_call.1} parent=1 // loop_pre_header
      _
    $region3: #{tpu_custom_call.1} parent=1 // loop_header
      %s23 = sphi 0, %s27
      %p24 = scmp.ge.s32.totalorder %s23, 4
      %s30 = sphi 0, %s42
      %s31 = sphi 0, %s38
      %s32 = sphi 0, %s30
      %s33 = sphi 0, %s31
      %s34 = sphi 0, %s32
      %s35 = sphi 0, %s33
      %s45 = sphi 0, %s47
      %s48 = sphi 0, %s45
      %s49 = sphi 0, %s48
      %s65 = sphi 0, %s49
      %s71 = sphi 0, %s73
      %s74 = sphi 0, %s71
      %s75 = sphi 0, %s74
      %s91 = sphi 0, %s75
      %s97 = sphi 0, %s99
      %s100 = sphi 0, %s97
      %s101 = sphi 0, %s100
      %s117 = sphi 0, %s101
      %s123 = sphi 0, %s125
      %s126 = sphi 0, %s123
      %s127 = sphi 0, %s126
      %s143 = sphi 0, %s127
      %s149 = sphi 0, %s151
      %s152 = sphi 0, %s149
      %s153 = sphi 0, %s152
      %s169 = sphi 0, %s153
      %s175 = sphi 0, %s177
      %s178 = sphi 0, %s175
      %s179 = sphi 0, %s178
      %s195 = sphi 0, %s179
      %s201 = sphi 0, %s203
      %s204 = sphi 0, %s201
      %s205 = sphi 0, %s204
      %s221 = sphi 0, %s205
      %s227 = sphi 0, %s229
      %s230 = sphi 0, %s227
      %s231 = sphi 0, %s230
      %s247 = sphi 0, %s231
      %s255 = sphi 0, %s257
      %s258 = sphi 0, %s255
      %s259 = sphi 0, %s258
      %s275 = sphi 0, %s259
    $region4: #{tpu_custom_call.1} parent=1 // loop_header_branch
      %26 = sbr.rel (%p24) target = $region8
    $region5: #{tpu_custom_call.1} parent=1 // loop_body
      %s28 = ssub.s32 %s23, 1
      %s29 = ssub.s32 %s23, 2
      %s36 = sadd.s32 1, %s31
      %p37 = scmp.ge.s32.totalorder %s36, 1
      %s38 = scalar_select %p37, 0, %s36
      %s39 = sadd.s32 1, %s30
      %s40 = scalar_select %p37, %s39, %s30
      %p41 = scmp.ge.s32.totalorder %s40, 2
      %s42 = scalar_select %p41, 0, %s40
      %s43 = ssub.s32 %s31, %s38
      %p44 = scmp.eq.s32.totalorder %s43, 0
      %s46 = sadd.s32 %s45, 1
      %s47 = scalar_select %p44, %s45, %s46
      %p50 = pneg %p44
      %p51 = scmp.eq.s32.totalorder %s23, 1
      %p52 = por %p50, %p51
      %p53 = scmp.ne.s32.totalorder %s45, %s48
      %p54 = scmp.eq.s32.totalorder %s23, 0
      %p55 = por %p53, %p54
      %p56 = scmp.ne.s32.totalorder %s45, %s48
      %p57 = scmp.eq.s32.totalorder %s28, 1
      %p58 = por %p56, %p57
      %p59 = scmp.ne.s32.totalorder %s48, %s49
      %p60 = scmp.eq.s32.totalorder %s28, 0
      %p61 = por %p59, %p60
      %p62 = scmp.ne.s32.totalorder %s48, %s49
      %p63 = scmp.eq.s32.totalorder %s29, 1
      %p64 = por %p62, %p63
      %p66 = scmp.ne.s32.totalorder %s49, %s65
      %p67 = scmp.eq.s32.totalorder %s29, 0
      %p68 = por %p66, %p67
      %s69 = ssub.s32 %s30, %s42
      %p70 = scmp.eq.s32.totalorder %s69, 0
      %s72 = sadd.s32 %s71, 1
      %s73 = scalar_select %p70, %s71, %s72
      %p76 = pneg %p70
      %p77 = scmp.eq.s32.totalorder %s23, 1
      %p78 = por %p76, %p77
      %p79 = scmp.ne.s32.totalorder %s71, %s74
      %p80 = scmp.eq.s32.totalorder %s23, 0
      %p81 = por %p79, %p80
      %p82 = scmp.ne.s32.totalorder %s71, %s74
      %p83 = scmp.eq.s32.totalorder %s28, 1
      %p84 = por %p82, %p83
      %p85 = scmp.ne.s32.totalorder %s74, %s75
      %p86 = scmp.eq.s32.totalorder %s28, 0
      %p87 = por %p85, %p86
      %p88 = scmp.ne.s32.totalorder %s74, %s75
      %p89 = scmp.eq.s32.totalorder %s29, 1
      %p90 = por %p88, %p89
      %p92 = scmp.ne.s32.totalorder %s75, %s91
      %p93 = scmp.eq.s32.totalorder %s29, 0
      %p94 = por %p92, %p93
      %s95 = ssub.s32 %s30, %s42
      %p96 = scmp.eq.s32.totalorder %s95, 0
      %s98 = sadd.s32 %s97, 1
      %s99 = scalar_select %p96, %s97, %s98
      %p102 = pneg %p96
      %p103 = scmp.eq.s32.totalorder %s23, 1
      %p104 = por %p102, %p103
      %p105 = scmp.ne.s32.totalorder %s97, %s100
      %p106 = scmp.eq.s32.totalorder %s23, 0
      %p107 = por %p105, %p106
      %p108 = scmp.ne.s32.totalorder %s97, %s100
      %p109 = scmp.eq.s32.totalorder %s28, 1
      %p110 = por %p108, %p109
      %p111 = scmp.ne.s32.totalorder %s100, %s101
      %p112 = scmp.eq.s32.totalorder %s28, 0
      %p113 = por %p111, %p112
      %p114 = scmp.ne.s32.totalorder %s100, %s101
      %p115 = scmp.eq.s32.totalorder %s29, 1
      %p116 = por %p114, %p115
      %p118 = scmp.ne.s32.totalorder %s101, %s117
      %p119 = scmp.eq.s32.totalorder %s29, 0
      %p120 = por %p118, %p119
      %s121 = ssub.s32 %s30, %s42
      %p122 = scmp.eq.s32.totalorder %s121, 0
      %s124 = sadd.s32 %s123, 1
      %s125 = scalar_select %p122, %s123, %s124
      %p128 = pneg %p122
      %p129 = scmp.eq.s32.totalorder %s23, 1
      %p130 = por %p128, %p129
      %p131 = scmp.ne.s32.totalorder %s123, %s126
      %p132 = scmp.eq.s32.totalorder %s23, 0
      %p133 = por %p131, %p132
      %p134 = scmp.ne.s32.totalorder %s123, %s126
      %p135 = scmp.eq.s32.totalorder %s28, 1
      %p136 = por %p134, %p135
      %p137 = scmp.ne.s32.totalorder %s126, %s127
      %p138 = scmp.eq.s32.totalorder %s28, 0
      %p139 = por %p137, %p138
      %p140 = scmp.ne.s32.totalorder %s126, %s127
      %p141 = scmp.eq.s32.totalorder %s29, 1
      %p142 = por %p140, %p141
      %p144 = scmp.ne.s32.totalorder %s127, %s143
      %p145 = scmp.eq.s32.totalorder %s29, 0
      %p146 = por %p144, %p145
      %s147 = ssub.s32 %s30, %s42
      %p148 = scmp.eq.s32.totalorder %s147, 0
      %s150 = sadd.s32 %s149, 1
      %s151 = scalar_select %p148, %s149, %s150
      %p154 = pneg %p148
      %p155 = scmp.eq.s32.totalorder %s23, 1
      %p156 = por %p154, %p155
      %p157 = scmp.ne.s32.totalorder %s149, %s152
      %p158 = scmp.eq.s32.totalorder %s23, 0
      %p159 = por %p157, %p158
      %p160 = scmp.ne.s32.totalorder %s149, %s152
      %p161 = scmp.eq.s32.totalorder %s28, 1
      %p162 = por %p160, %p161
      %p163 = scmp.ne.s32.totalorder %s152, %s153
      %p164 = scmp.eq.s32.totalorder %s28, 0
      %p165 = por %p163, %p164
      %p166 = scmp.ne.s32.totalorder %s152, %s153
      %p167 = scmp.eq.s32.totalorder %s29, 1
      %p168 = por %p166, %p167
      %p170 = scmp.ne.s32.totalorder %s153, %s169
      %p171 = scmp.eq.s32.totalorder %s29, 0
      %p172 = por %p170, %p171
      %s173 = ssub.s32 %s30, %s42
      %p174 = scmp.eq.s32.totalorder %s173, 0
      %s176 = sadd.s32 %s175, 1
      %s177 = scalar_select %p174, %s175, %s176
      %p180 = pneg %p174
      %p181 = scmp.eq.s32.totalorder %s23, 1
      %p182 = por %p180, %p181
      %p183 = scmp.ne.s32.totalorder %s175, %s178
      %p184 = scmp.eq.s32.totalorder %s23, 0
      %p185 = por %p183, %p184
      %p186 = scmp.ne.s32.totalorder %s175, %s178
      %p187 = scmp.eq.s32.totalorder %s28, 1
      %p188 = por %p186, %p187
      %p189 = scmp.ne.s32.totalorder %s178, %s179
      %p190 = scmp.eq.s32.totalorder %s28, 0
      %p191 = por %p189, %p190
      %p192 = scmp.ne.s32.totalorder %s178, %s179
      %p193 = scmp.eq.s32.totalorder %s29, 1
      %p194 = por %p192, %p193
      %p196 = scmp.ne.s32.totalorder %s179, %s195
      %p197 = scmp.eq.s32.totalorder %s29, 0
      %p198 = por %p196, %p197
      %s199 = ssub.s32 %s30, %s42
      %p200 = scmp.eq.s32.totalorder %s199, 0
      %s202 = sadd.s32 %s201, 1
      %s203 = scalar_select %p200, %s201, %s202
      %p206 = pneg %p200
      %p207 = scmp.eq.s32.totalorder %s23, 1
      %p208 = por %p206, %p207
      %p209 = scmp.ne.s32.totalorder %s201, %s204
      %p210 = scmp.eq.s32.totalorder %s23, 0
      %p211 = por %p209, %p210
      %p212 = scmp.ne.s32.totalorder %s201, %s204
      %p213 = scmp.eq.s32.totalorder %s28, 1
      %p214 = por %p212, %p213
      %p215 = scmp.ne.s32.totalorder %s204, %s205
      %p216 = scmp.eq.s32.totalorder %s28, 0
      %p217 = por %p215, %p216
      %p218 = scmp.ne.s32.totalorder %s204, %s205
      %p219 = scmp.eq.s32.totalorder %s29, 1
      %p220 = por %p218, %p219
      %p222 = scmp.ne.s32.totalorder %s205, %s221
      %p223 = scmp.eq.s32.totalorder %s29, 0
      %p224 = por %p222, %p223
      %s225 = ssub.s32 %s30, %s42
      %p226 = scmp.eq.s32.totalorder %s225, 0
      %s228 = sadd.s32 %s227, 1
      %s229 = scalar_select %p226, %s227, %s228
      %p232 = pneg %p226
      %p233 = scmp.eq.s32.totalorder %s23, 1
      %p234 = por %p232, %p233
      %p235 = scmp.ne.s32.totalorder %s227, %s230
      %p236 = scmp.eq.s32.totalorder %s23, 0
      %p237 = por %p235, %p236
      %p238 = scmp.ne.s32.totalorder %s227, %s230
      %p239 = scmp.eq.s32.totalorder %s28, 1
      %p240 = por %p238, %p239
      %p241 = scmp.ne.s32.totalorder %s230, %s231
      %p242 = scmp.eq.s32.totalorder %s28, 0
      %p243 = por %p241, %p242
      %p244 = scmp.ne.s32.totalorder %s230, %s231
      %p245 = scmp.eq.s32.totalorder %s29, 1
      %p246 = por %p244, %p245
      %p248 = scmp.ne.s32.totalorder %s231, %s247
      %p249 = scmp.eq.s32.totalorder %s29, 0
      %p250 = por %p248, %p249
      %s251 = ssub.s32 %s30, %s42
      %s252 = ssub.s32 %s31, %s38
      %s253 = sor.u32 %s251, %s252
      %p254 = scmp.eq.s32.totalorder %s253, 0
      %s256 = sadd.s32 %s255, 1
      %s257 = scalar_select %p254, %s255, %s256
      %p260 = pneg %p254
      %p261 = scmp.eq.s32.totalorder %s23, 1
      %p262 = por %p260, %p261
      %p263 = scmp.ne.s32.totalorder %s255, %s258
      %p264 = scmp.eq.s32.totalorder %s23, 0
      %p265 = por %p263, %p264
      %p266 = scmp.ne.s32.totalorder %s255, %s258
      %p267 = scmp.eq.s32.totalorder %s28, 1
      %p268 = por %p266, %p267
      %p269 = scmp.ne.s32.totalorder %s258, %s259
      %p270 = scmp.eq.s32.totalorder %s28, 0
      %p271 = por %p269, %p270
      %p272 = scmp.ne.s32.totalorder %s258, %s259
      %p273 = scmp.eq.s32.totalorder %s29, 1
      %p274 = por %p272, %p273
      %p276 = scmp.ne.s32.totalorder %s259, %s275
      %p277 = scmp.eq.s32.totalorder %s29, 0
      %p278 = por %p276, %p277
      %p279 = scmp.le.s32.totalorder 1, %s23
      %p280 = scmp.lt.s32.totalorder %s23, 3
      %p281 = pnand %p279, %p280
      %p282 = pneg %p281
      // Predicated region
      $region9: #{tpu_custom_call.1} parent=5 // pred_check
        _
      $region10: #{tpu_custom_call.1} parent=5 // pred_check_branch
        %284 = sbr.rel (%p281) target = $region12
      $region11: #{tpu_custom_call.1} parent=5 // pred_region
        %s285 = ssub.s32 %s23, 1
        // Predicated region
        $region13: #{tpu_custom_call.1} parent=11 // pred_check
          %p286 = pneg %p61
        $region14: #{tpu_custom_call.1} parent=11 // pred_check_branch
          %288 = sbr.rel (%p286) target = $region16
        $region15: #{tpu_custom_call.1} parent=11 // pred_region
          %s289 = smul.u32 2, %s33
          %p290 = scmp.lt.s32.totalorder %s289, 1
          %s291 = scalar_select %p290, %s289, 1
          %s292 = smul.addr %s291, 8
          %s293 = scalar_lea.vmem %s0, %s292
          %s294 = smul.u32 2, %s33
        $region16: #{tpu_custom_call.1} parent=11 // pred_fallthru
          _
      $region12: #{tpu_custom_call.1} parent=5 // pred_fallthru
        _
      %p295 = scmp.lt.s32.totalorder %s23, 2
      // Predicated region
      $region17: #{tpu_custom_call.1} parent=5 // pred_check
        %p296 = pneg %p295
      $region18: #{tpu_custom_call.1} parent=5 // pred_check_branch
        %298 = sbr.rel (%p296) target = $region20
      $region19: #{tpu_custom_call.1} parent=5 // pred_region
        // Predicated region
        $region21: #{tpu_custom_call.1} parent=19 // pred_check
          %p299 = pneg %p81
        $region22: #{tpu_custom_call.1} parent=19 // pred_check_branch
          %301 = sbr.rel (%p299) target = $region24
        $region23: #{tpu_custom_call.1} parent=19 // pred_region
          %p302 = scmp.lt.s32.totalorder %s30, 1
          %s303 = scalar_select %p302, %s30, 1
          %s304 = smul.addr %s303, 8
          %s305 = smul.addr %s304, 8
          %s306 = scalar_lea.vmem %s1, %s305
        $region24: #{tpu_custom_call.1} parent=19 // pred_fallthru
          _
        // Predicated region
        $region25: #{tpu_custom_call.1} parent=19 // pred_check
          %p307 = pneg %p107
        $region26: #{tpu_custom_call.1} parent=19 // pred_check_branch
          %309 = sbr.rel (%p307) target = $region28
        $region27: #{tpu_custom_call.1} parent=19 // pred_region
          %s310 = sand.u32 %s97, 1
          %s311 = scalar_lea.sflag [#allocation3], %s310
          %s312 = sand.u32 %s97, 1
          %s313 = smul.addr %s312, 256
          %s314 = scalar_lea.vmem [#allocation2], %s313
          %s316 = ssub.s32 4096, 4096
          %317 = vsyncadd %s311, %s316
          %s318 = smul.addr %s30, 32
          %s319 = smul.addr %s318, 128
          %s320 = scalar_lea.hbm %s2, %s319
          %s321 = sshll.u32 %s314, 4
          %s322 = int_to_ptr.vmem [resolvable:$true] %s321
          %327 = dma.hbm_to_vmem [thread:$0]  %s320, 4096, %s322, %s311, 128, 128, 8
        $region28: #{tpu_custom_call.1} parent=19 // pred_fallthru
          _
        // Predicated region
        $region29: #{tpu_custom_call.1} parent=19 // pred_check
          %p328 = pneg %p133
        $region30: #{tpu_custom_call.1} parent=19 // pred_check_branch
          %330 = sbr.rel (%p328) target = $region32
        $region31: #{tpu_custom_call.1} parent=19 // pred_region
          %s331 = sand.u32 %s23, 1
          %s332 = scalar_lea.sflag [#allocation6], %s331
          %s333 = sand.u32 %s123, 1
          %s334 = smul.addr %s333, 256
          %s335 = scalar_lea.vmem [#allocation5], %s334
          %s337 = ssub.s32 4096, 4096
          %338 = vsyncadd %s332, %s337
          %s339 = smul.addr %s30, 32
          %s340 = smul.addr %s339, 128
          %s341 = scalar_lea.hbm %s3, %s340
          %s342 = sshll.u32 %s335, 4
          %s343 = int_to_ptr.vmem [resolvable:$true] %s342
          %348 = dma.hbm_to_vmem [thread:$0]  %s341, 4096, %s343, %s332, 128, 128, 8
        $region32: #{tpu_custom_call.1} parent=19 // pred_fallthru
          _
        // Predicated region
        $region33: #{tpu_custom_call.1} parent=19 // pred_check
          %p349 = pneg %p159
        $region34: #{tpu_custom_call.1} parent=19 // pred_check_branch
          %351 = sbr.rel (%p349) target = $region36
        $region35: #{tpu_custom_call.1} parent=19 // pred_region
          %s352 = sand.u32 %s23, 1
          %s353 = scalar_lea.sflag [#allocation6], %s352
          %s354 = sand.u32 %s149, 1
          %s355 = smul.addr %s354, 128
          %s356 = scalar_lea.vmem [#allocation7], %s355
          %s358 = ssub.s32 2048, 2048
          %359 = vsyncadd %s353, %s358
          %s360 = smul.addr %s30, 16
          %s361 = smul.addr %s360, 128
          %s362 = scalar_lea.hbm %s4, %s361
          %s363 = sshll.u32 %s356, 4
          %s364 = int_to_ptr.vmem [resolvable:$true] %s363
          %369 = dma.hbm_to_vmem [thread:$0]  %s362, 2048, %s364, %s353, 128, 128, 8
        $region36: #{tpu_custom_call.1} parent=19 // pred_fallthru
          _
        // Predicated region
        $region37: #{tpu_custom_call.1} parent=19 // pred_check
          %p370 = pneg %p185
        $region38: #{tpu_custom_call.1} parent=19 // pred_check_branch
          %372 = sbr.rel (%p370) target = $region40
        $region39: #{tpu_custom_call.1} parent=19 // pred_region
          %p373 = scmp.lt.s32.totalorder %s30, 1
          %s374 = scalar_select %p373, %s30, 1
          %s375 = smul.addr %s374, 8
          %s376 = scalar_lea.vmem %s5, %s375
        $region40: #{tpu_custom_call.1} parent=19 // pred_fallthru
          _
        // Predicated region
        $region41: #{tpu_custom_call.1} parent=19 // pred_check
          %p377 = pneg %p211
        $region42: #{tpu_custom_call.1} parent=19 // pred_check_branch
          %379 = sbr.rel (%p377) target = $region44
        $region43: #{tpu_custom_call.1} parent=19 // pred_region
          %p380 = scmp.lt.s32.totalorder %s30, 1
          %s381 = scalar_select %p380, %s30, 1
          %s382 = smul.addr %s381, 2
          %s383 = scalar_lea.vmem %s6, %s382
        $region44: #{tpu_custom_call.1} parent=19 // pred_fallthru
          _
        // Predicated region
        $region45: #{tpu_custom_call.1} parent=19 // pred_check
          %p384 = pneg %p237
        $region46: #{tpu_custom_call.1} parent=19 // pred_check_branch
          %386 = sbr.rel (%p384) target = $region48
        $region47: #{tpu_custom_call.1} parent=19 // pred_region
          %p387 = scmp.lt.s32.totalorder %s30, 1
          %s388 = scalar_select %p387, %s30, 1
          %s389 = scalar_lea.vmem %s7, %s388
        $region48: #{tpu_custom_call.1} parent=19 // pred_fallthru
          _
      $region20: #{tpu_custom_call.1} parent=5 // pred_fallthru
        _
      %p390 = scmp.le.s32.totalorder 1, %s23
      %p391 = scmp.lt.s32.totalorder %s23, 3
      %p392 = pnand %p390, %p391
      %p393 = pneg %p392
      // Predicated region
      $region49: #{tpu_custom_call.1} parent=5 // pred_check
        _
      $region50: #{tpu_custom_call.1} parent=5 // pred_check_branch
        %395 = sbr.rel (%p392) target = $region52
      $region51: #{tpu_custom_call.1} parent=5 // pred_region
        %s396 = ssub.s32 %s23, 1
        %s397 = sand.u32 %s100, 1
        %s398 = scalar_lea.sflag [#allocation3], %s397
        %s399 = sand.u32 %s100, 1
        %s400 = smul.addr %s399, 256
        %s401 = scalar_lea.vmem [#allocation2], %s400
        // Predicated region
        $region53: #{tpu_custom_call.1} parent=51 // pred_check
          %p402 = pneg %p113
        $region54: #{tpu_custom_call.1} parent=51 // pred_check_branch
          %404 = sbr.rel (%p402) target = $region56
        $region55: #{tpu_custom_call.1} parent=51 // pred_region
          %405 = dma.done %s398, 4096
        $region56: #{tpu_custom_call.1} parent=51 // pred_fallthru
          _
        %s406 = sand.u32 %s28, 1
        %s407 = scalar_lea.sflag [#allocation6], %s406
        %s408 = sand.u32 %s126, 1
        %s409 = smul.addr %s408, 256
        %s410 = scalar_lea.vmem [#allocation5], %s409
        // Predicated region
        $region57: #{tpu_custom_call.1} parent=51 // pred_check
          %p411 = pneg %p139
        $region58: #{tpu_custom_call.1} parent=51 // pred_check_branch
          %413 = sbr.rel (%p411) target = $region60
        $region59: #{tpu_custom_call.1} parent=51 // pred_region
          %414 = dma.done %s407, 4096
        $region60: #{tpu_custom_call.1} parent=51 // pred_fallthru
          _
        %s415 = sand.u32 %s28, 1
        %s416 = scalar_lea.sflag [#allocation6], %s415
        %s417 = sand.u32 %s152, 1
        %s418 = smul.addr %s417, 128
        %s419 = scalar_lea.vmem [#allocation7], %s418
        // Predicated region
        $region61: #{tpu_custom_call.1} parent=51 // pred_check
          %p420 = pneg %p165
        $region62: #{tpu_custom_call.1} parent=51 // pred_check_branch
          %422 = sbr.rel (%p420) target = $region64
        $region63: #{tpu_custom_call.1} parent=51 // pred_region
          %423 = dma.done %s416, 2048
        $region64: #{tpu_custom_call.1} parent=51 // pred_fallthru
          _
        %s424 = smul.u32 2, %s33
        %p425 = scmp.lt.s32.totalorder %s424, 1
        %s426 = scalar_select %p425, %s424, 1
        %s427 = smul.addr %s426, 8
        %s428 = scalar_lea.vmem %s0, %s427
        %p429 = pneg %p61
        %p430 = pneg %p58
        %p431 = scmp.lt.s32.totalorder %s32, 1
        %s432 = scalar_select %p431, %s32, 1
        %s433 = smul.addr %s432, 8
        %s434 = smul.addr %s433, 8
        %s435 = scalar_lea.vmem %s1, %s434
        %p436 = pneg %p87
        %p437 = pneg %p84
        %s438 = sand.u32 %s100, 1
        %s439 = scalar_lea.sflag [#allocation3], %s438
        %s440 = sand.u32 %s100, 1
        %s441 = smul.addr %s440, 256
        %s442 = scalar_lea.vmem [#allocation2], %s441
        %p443 = pneg %p113
        %p444 = pneg %p110
        %s445 = sand.u32 %s28, 1
        %s446 = scalar_lea.sflag [#allocation6], %s445
        %s447 = sand.u32 %s126, 1
        %s448 = smul.addr %s447, 256
        %s449 = scalar_lea.vmem [#allocation5], %s448
        %p450 = pneg %p139
        %p451 = pneg %p136
        %s452 = sand.u32 %s28, 1
        %s453 = scalar_lea.sflag [#allocation6], %s452
        %s454 = sand.u32 %s152, 1
        %s455 = smul.addr %s454, 128
        %s456 = scalar_lea.vmem [#allocation7], %s455
        %p457 = pneg %p165
        %p458 = pneg %p162
        %p459 = scmp.lt.s32.totalorder %s32, 1
        %s460 = scalar_select %p459, %s32, 1
        %s461 = smul.addr %s460, 8
        %s462 = scalar_lea.vmem %s5, %s461
        %p463 = pneg %p191
        %p464 = pneg %p188
        %p465 = scmp.lt.s32.totalorder %s32, 1
        %s466 = scalar_select %p465, %s32, 1
        %s467 = smul.addr %s466, 2
        %s468 = scalar_lea.vmem %s6, %s467
        %p469 = pneg %p217
        %p470 = pneg %p214
        %p471 = scmp.lt.s32.totalorder %s32, 1
        %s472 = scalar_select %p471, %s32, 1
        %s473 = scalar_lea.vmem %s7, %s472
        %p474 = pneg %p243
        %p475 = pneg %p240
        %p476 = pneg %p271
        %p477 = pneg %p268
        %s478 = sand.u32 %s258, 1
        %s479 = scalar_lea.sflag [#allocation4], %s478
        %s480 = sand.u32 %s258, 1
        %s481 = smul.addr %s480, 16
        %s482 = scalar_lea.vmem [#allocation8], %s481
        %s483 = smul.u32 2, %s33
        %p484 = scmp.lt.s32.totalorder %s483, 1
        %s485 = scalar_select %p484, %s483, 1
        %s486 = smul.addr %s485, 8
        %s487 = scalar_lea.vmem %s0, %s486
        %s488 = smul.u32 2, %s33
        %p489 = scmp.lt.s32.totalorder %s32, 1
        %s490 = scalar_select %p489, %s32, 1
        %s491 = smul.addr %s490, 8
        %s492 = smul.addr %s491, 8
        %s493 = scalar_lea.vmem %s1, %s492
        %p494 = scmp.lt.s32.totalorder %s32, 1
        %s495 = scalar_select %p494, %s32, 1
        %s496 = smul.addr %s495, 8
        %s497 = scalar_lea.vmem %s5, %s496
        %p498 = scmp.lt.s32.totalorder %s32, 1
        %s499 = scalar_select %p498, %s32, 1
        %s500 = smul.addr %s499, 2
        %s501 = scalar_lea.vmem %s6, %s500
        %p502 = scmp.lt.s32.totalorder %s32, 1
        %s503 = scalar_select %p502, %s32, 1
        %s504 = scalar_lea.vmem %s7, %s503
        %s505 = smul.u32 2, %s33
        %v506 = vld [vmem:[%s487] sm:$0xff]
        %v507 = vld [vmem:[%s487 + $0x8] sm:$0xff]
        %v508 = vld [vmem:[%s497] sm:$0xff]
        %v509 = vld [vmem:[%s501] sm:$0x3]
        %v510 = vld [vmem:[%s493] sm:$0xff]
        %v511 = vld [vmem:[%s493 + $0x8] sm:$0xff]
        %v512 = vld [vmem:[%s493 + $0x10] sm:$0xff]
        %v513 = vld [vmem:[%s493 + $0x18] sm:$0xff]
        %v514 = vld [vmem:[%s493 + $0x20] sm:$0xff]
        %v515 = vld [vmem:[%s493 + $0x28] sm:$0xff]
        %v516 = vld [vmem:[%s493 + $0x30] sm:$0xf]
        %v517 = vld [vmem:[%s493 + $0x38] sm:$0xf]
        %vm518 = vcmask 228352
        %v520 = vsel %vm518, %v506, 0
        %v523 = vsel %vm518, %v507, 0
        %vm525 = vcmask 1043456
        %v527 = vsel %vm525, %v516, 0
        %v530 = vsel %vm525, %v517, 0
        %532 = vmatprep.subr.mxu0 %v511
        %533 = vmatpush1.msra.mxu0 %v510
        %534 = vmatprep.subr.mxu0 %v513
        %535 = vmatpush1.msra.mxu0 %v512
        %536 = vmatprep.subr.mxu0 %v515
        %537 = vmatpush1.msra.mxu0 %v514
        %538 = vmatprep.subr.mxu0 %v530
        %539 = vmatpush1.msra.mxu0 %v527
        %540 = vmatprep.subr.mxu0 0.0
        %541 = vmatpush1.msra.mxu0 0.0
        %542 = vmatprep.subr.mxu0 0.0
        %543 = vmatpush1.msra.mxu0 0.0
        %544 = vmatprep.subr.mxu0 0.0
        %545 = vmatpush1.msra.mxu0 0.0
        %546 = vmatprep.subr.mxu0 0.0
        %547 = vmatpush1.msra.mxu0 0.0
        %548 = vmatprep.subr.mxu0 0.0
        %549 = vmatpush1.msra.mxu0 0.0
        %550 = vmatprep.subr.mxu0 0.0
        %551 = vmatpush1.msra.mxu0 0.0
        %552 = vmatprep.subr.mxu0 0.0
        %553 = vmatpush1.msra.mxu0 0.0
        %554 = vmatprep.subr.mxu0 0.0
        %555 = vmatpush1.msra.mxu0 0.0
        %556 = vmatprep.subr.mxu0 0.0
        %557 = vmatpush1.msra.mxu0 0.0
        %558 = vmatprep.subr.mxu0 0.0
        %559 = vmatpush1.msra.mxu0 0.0
        %560 = vmatprep.subr.mxu0 0.0
        %561 = vmatpush1.msra.mxu0 0.0
        %562 = vmatprep.subr.mxu0 0.0
        %563 = vmatpush1.msra.mxu0 0.0
        %564 = vmatprep.subr.mxu0 0.0
        %565 = vmatpush1.msra.mxu0 0.0
        %566 = vmatprep.subr.mxu0 0.0
        %567 = vmatpush1.msra.mxu0 0.0
        %568 = vmatprep.subr.mxu0 0.0
        %569 = vmatpush1.msra.mxu0 0.0
        %570 = vmatprep.subr.mxu0 0.0
        %571 = vmatpush1.msra.mxu0 0.0
        %572 = vmatprep.subr.mxu0 0.0
        %573 = vmatpush1.msra.mxu0 0.0
        %574 = vmatprep.subr.mxu0 0.0
        %575 = vmatpush1.msra.mxu0 0.0
        %576 = vmatprep.subr.mxu0 0.0
        %577 = vmatpush1.msra.mxu0 0.0
        %578 = vmatprep.subr.mxu0 0.0
        %579 = vmatpush1.msra.mxu0 0.0
        %580 = vmatprep.subr.mxu0 0.0
        %581 = vmatpush1.msra.mxu0 0.0
        %582 = vmatprep.subr.mxu0 0.0
        %583 = vmatpush1.msra.mxu0 0.0
        %584 = vmatprep.subr.mxu0 0.0
        %585 = vmatpush1.msra.mxu0 0.0
        %586 = vmatprep.subr.mxu0 0.0
        %587 = vmatpush1.msra.mxu0 0.0
        %588 = vmatprep.subr.mxu0 0.0
        %589 = vmatpush1.msra.mxu0 0.0
        %590 = vmatprep.subr.mxu0 0.0
        %591 = vmatpush1.msra.mxu0 0.0
        %592 = vmatprep.subr.mxu0 0.0
        %593 = vmatpush1.msra.mxu0 0.0
        %594 = vmatprep.subr.mxu0 0.0
        %595 = vmatpush1.msra.mxu0 0.0
        %596 = vmatprep.mubr.f32.mxu0 0.0
        %597 = vmatmul.mubr.f32.gmra.mrb[0].mxu0 %v520
        %v598 = vpop.f32.mrb[0].mxu0
        %v599 = vadd.f32 0.0, %v598
        %v600 = vpop.f32.mrb[0].mxu0
        %v601 = vadd.f32 0.0, %v600
        %602 = vmatprep.mubr.f32.mxu0 0.0
        %603 = vmatmul.mubr.f32.gmra.mrb[0].mxu0 %v523
        %v604 = vpop.f32.mrb[0].mxu0
        %v605 = vadd.f32 0.0, %v604
        %v606 = vpop.f32.mrb[0].mxu0
        %v607 = vadd.f32 0.0, %v606
        %608 = vdwg.mxu0
        %v609 = vlaneseq
        %v610 = vshrl.u32 %v609, 7
        %v611 = vsub.s32 0, %v610
        %v612 = vrot.slane %v508, %v611
        %v613 = vadd.f32 %v599, %v612
        %v614 = vadd.f32 %v605, %v612
        %615 = vadd.xlane.f32.xlu0 %v613
        %v616 = vpop.xlane.xlu0 %615
        %617 = vadd.xlane.f32.xlu0 %v614
        %v618 = vpop.xlane.xlu0 %617
        %v619 = vmul.f32 %v616, 0.03125
        %v620 = vmul.f32 %v618, 0.03125
        %v621 = vsub.f32 %v613, %v619
        %v622 = vsub.f32 %v614, %v620
        %v623 = vmul.f32 %v621, %v621
        %v624 = vmul.f32 %v622, %v622
        %625 = vadd.xlane.f32.xlu0 %v623
        %v626 = vpop.xlane.xlu0 %625
        %627 = vadd.xlane.f32.xlu0 %v624
        %v628 = vpop.xlane.xlu0 %627
        %v629 = vmul.f32 %v619, %v619
        %v630 = vmul.f32 %v620, %v620
        %v631 = vmul.f32 %v629, 96.0
        %v632 = vmul.f32 %v630, 96.0
        %v633 = vsub.f32 %v626, %v631
        %v634 = vsub.f32 %v628, %v632
        %v635 = vmul.f32 %v633, 0.03125
        %v636 = vmul.f32 %v634, 0.03125
        %v637 = vmax.f32 %v635, 0.0
        %v638 = vmax.f32 %v636, 0.0
        %v639 = vadd.f32 %v637, 1e-05
        %v640 = vadd.f32 %v638, 1e-05
        %v641 = vrsqrt.pop %v639
        %v642 = vrsqrt.pop %v640
        %v643 = vmul.f32 %v621, %v641
        %v644 = vmul.f32 %v622, %v642
        %v645 = vlaneseq
        %v646 = vshrl.u32 %v645, 7
        %v647 = vsub.s32 1, %v646
        %v648 = vrot.slane %v508, %v647
        %v649 = vmul.f32 %v643, %v648
        %v650 = vmul.f32 %v644, %v648
        %v651 = vlaneseq
        %v652 = vshrl.u32 %v651, 7
        %v653 = vsub.s32 2, %v652
        %v654 = vrot.slane %v508, %v653
        %v655 = vadd.f32 %v649, %v654
        %v656 = vadd.f32 %v650, %v654
        %v657 = vtanh.pop %v655
        %v658 = vtanh.pop %v656
        %v659 = vlaneseq
        %v660 = vshrl.u32 %v659, 7
        %v661 = vsub.s32 3, %v660
        %v662 = vrot.slane %v508, %v661
        %v663 = vadd.f32 %v601, %v662
        %v664 = vadd.f32 %v607, %v662
        %665 = vadd.xlane.f32.xlu0 %v663
        %v666 = vpop.xlane.xlu0 %665
        %667 = vadd.xlane.f32.xlu0 %v664
        %v668 = vpop.xlane.xlu0 %667
        %v669 = vmul.f32 %v666, 0.03125
        %v670 = vmul.f32 %v668, 0.03125
        %v671 = vsub.f32 %v663, %v669
        %v672 = vsub.f32 %v664, %v670
        %v673 = vmul.f32 %v671, %v671
        %v674 = vmul.f32 %v672, %v672
        %675 = vadd.xlane.f32.xlu0 %v673
        %v676 = vpop.xlane.xlu0 %675
        %677 = vadd.xlane.f32.xlu0 %v674
        %v678 = vpop.xlane.xlu0 %677
        %v679 = vmul.f32 %v669, %v669
        %v680 = vmul.f32 %v670, %v670
        %v681 = vmul.f32 %v679, 96.0
        %v682 = vmul.f32 %v680, 96.0
        %v683 = vsub.f32 %v676, %v681
        %v684 = vsub.f32 %v678, %v682
        %v685 = vmul.f32 %v683, 0.03125
        %v686 = vmul.f32 %v684, 0.03125
        %v687 = vmax.f32 %v685, 0.0
        %v688 = vmax.f32 %v686, 0.0
        %v689 = vadd.f32 %v687, 1e-05
        %v690 = vadd.f32 %v688, 1e-05
        %v691 = vrsqrt.pop %v689
        %v692 = vrsqrt.pop %v690
        %v693 = vmul.f32 %v671, %v691
        %v694 = vmul.f32 %v672, %v692
        %v695 = vlaneseq
        %v696 = vshrl.u32 %v695, 7
        %v697 = vsub.s32 4, %v696
        %v698 = vrot.slane %v508, %v697
        %v699 = vmul.f32 %v693, %v698
        %v700 = vmul.f32 %v694, %v698
        %v701 = vlaneseq
        %v702 = vshrl.u32 %v701, 7
        %v703 = vsub.s32 5, %v702
        %v704 = vrot.slane %v508, %v703
        %v705 = vadd.f32 %v699, %v704
        %v706 = vadd.f32 %v700, %v704
        %v707 = vtanh.pop %v705
        %v708 = vtanh.pop %v706
        %v709 = vld [vmem:[%s401] sm:$0xff]
        %v710 = vld [vmem:[%s401 + $0x8] sm:$0xff]
        %v711 = vld [vmem:[%s401 + $0x10] sm:$0xff]
        %v712 = vld [vmem:[%s401 + $0x18] sm:$0xff]
        %v713 = vld [vmem:[%s401 + $0x20] sm:$0xff]
        %v714 = vld [vmem:[%s401 + $0x28] sm:$0xff]
        %v715 = vld [vmem:[%s401 + $0x30] sm:$0xff]
        %v716 = vld [vmem:[%s401 + $0x38] sm:$0xff]
        %v717 = vld [vmem:[%s401 + $0x40] sm:$0xff]
        %v718 = vld [vmem:[%s401 + $0x48] sm:$0xff]
        %v719 = vld [vmem:[%s401 + $0x50] sm:$0xff]
        %v720 = vld [vmem:[%s401 + $0x58] sm:$0xff]
        %v721 = vld [vmem:[%s401 + $0x60] sm:$0xff]
        %v722 = vld [vmem:[%s401 + $0x68] sm:$0xff]
        %v723 = vld [vmem:[%s401 + $0x70] sm:$0xff]
        %v724 = vld [vmem:[%s401 + $0x78] sm:$0xff]
        %v725 = vlaneseq
        %v726 = vshrl.u32 %v725, 7
        %v727 = vsub.s32 0, %v726
        %v728 = vrot.slane %v509, %v727
        %729 = vmatprep.subr.mxu0 0.0
        %730 = vmatpush1.msra.mxu0 %v709
        %731 = vmatprep.subr.mxu0 0.0
        %732 = vmatpush1.msra.mxu0 %v710
        %733 = vmatprep.subr.mxu0 0.0
        %734 = vmatpush1.msra.mxu0 %v711
        %735 = vmatprep.subr.mxu0 0.0
        %736 = vmatpush1.msra.mxu0 %v712
        %737 = vmatprep.subr.mxu0 0.0
        %738 = vmatpush1.msra.mxu0 %v713
        %739 = vmatprep.subr.mxu0 0.0
        %740 = vmatpush1.msra.mxu0 %v714
        %741 = vmatprep.subr.mxu0 0.0
        %742 = vmatpush1.msra.mxu0 %v715
        %743 = vmatprep.subr.mxu0 0.0
        %744 = vmatpush1.msra.mxu0 %v716
        %745 = vmatprep.subr.mxu0 0.0
        %746 = vmatpush1.msra.mxu0 %v717
        %747 = vmatprep.subr.mxu0 0.0
        %748 = vmatpush1.msra.mxu0 %v718
        %749 = vmatprep.subr.mxu0 0.0
        %750 = vmatpush1.msra.mxu0 %v719
        %751 = vmatprep.subr.mxu0 0.0
        %752 = vmatpush1.msra.mxu0 %v720
        %753 = vmatprep.subr.mxu0 0.0
        %754 = vmatpush1.msra.mxu0 %v721
        %755 = vmatprep.subr.mxu0 0.0
        %756 = vmatpush1.msra.mxu0 %v722
        %757 = vmatprep.subr.mxu0 0.0
        %758 = vmatpush1.msra.mxu0 %v723
        %759 = vmatprep.subr.mxu0 0.0
        %760 = vmatpush1.msra.mxu0 %v724
        %761 = vmatprep.subr.mxu0 0.0
        %762 = vmatpush1.msra.mxu0 0.0
        %763 = vmatprep.subr.mxu0 0.0
        %764 = vmatpush1.msra.mxu0 0.0
        %765 = vmatprep.subr.mxu0 0.0
        %766 = vmatpush1.msra.mxu0 0.0
        %767 = vmatprep.subr.mxu0 0.0
        %768 = vmatpush1.msra.mxu0 0.0
        %769 = vmatprep.subr.mxu0 0.0
        %770 = vmatpush1.msra.mxu0 0.0
        %771 = vmatprep.subr.mxu0 0.0
        %772 = vmatpush1.msra.mxu0 0.0
        %773 = vmatprep.subr.mxu0 0.0
        %774 = vmatpush1.msra.mxu0 0.0
        %775 = vmatprep.subr.mxu0 0.0
        %776 = vmatpush1.msra.mxu0 0.0
        %777 = vmatprep.subr.mxu0 0.0
        %778 = vmatpush1.msra.mxu0 0.0
        %779 = vmatprep.subr.mxu0 0.0
        %780 = vmatpush1.msra.mxu0 0.0
        %781 = vmatprep.subr.mxu0 0.0
        %782 = vmatpush1.msra.mxu0 0.0
        %783 = vmatprep.subr.mxu0 0.0
        %784 = vmatpush1.msra.mxu0 0.0
        %785 = vmatprep.subr.mxu0 0.0
        %786 = vmatpush1.msra.mxu0 0.0
        %787 = vmatprep.subr.mxu0 0.0
        %788 = vmatpush1.msra.mxu0 0.0
        %789 = vmatprep.subr.mxu0 0.0
        %790 = vmatpush1.msra.mxu0 0.0
        %791 = vmatprep.subr.mxu0 0.0
        %792 = vmatpush1.msra.mxu0 0.0
        %793 = vmatprep.mubr.f32.mxu0 0.0
        %794 = vmatmul.mubr.f32.gmra.mrb[0].mxu0 %v657
        %v795 = vpop.f32.mrb[0].mxu0
        %v796 = vadd.f32 %v728, %v795
        %v797 = vpop.f32.mrb[0].mxu0
        %798 = vmatprep.mubr.f32.mxu0 0.0
        %799 = vmatmul.mubr.f32.gmra.mrb[0].mxu0 %v658
        %v800 = vpop.f32.mrb[0].mxu0
        %v801 = vadd.f32 %v728, %v800
        %v802 = vpop.f32.mrb[0].mxu0
        %803 = vdwg.mxu0
        %v804 = vmax.f32 %v796, 0.0
        %v805 = vmax.f32 %v801, 0.0
        %s806 = scalar_lea.vmem %s401, 128 [#allocation2]
        %v807 = vld [vmem:[%s806] sm:$0xff]
        %v808 = vld [vmem:[%s806 + $0x8] sm:$0xff]
        %v809 = vld [vmem:[%s806 + $0x10] sm:$0xff]
        %v810 = vld [vmem:[%s806 + $0x18] sm:$0xff]
        %v811 = vld [vmem:[%s806 + $0x20] sm:$0xff]
        %v812 = vld [vmem:[%s806 + $0x28] sm:$0xff]
        %v813 = vld [vmem:[%s806 + $0x30] sm:$0xff]
        %v814 = vld [vmem:[%s806 + $0x38] sm:$0xff]
        %v815 = vld [vmem:[%s806 + $0x40] sm:$0xff]
        %v816 = vld [vmem:[%s806 + $0x48] sm:$0xff]
        %v817 = vld [vmem:[%s806 + $0x50] sm:$0xff]
        %v818 = vld [vmem:[%s806 + $0x58] sm:$0xff]
        %v819 = vld [vmem:[%s806 + $0x60] sm:$0xff]
        %v820 = vld [vmem:[%s806 + $0x68] sm:$0xff]
        %v821 = vld [vmem:[%s806 + $0x70] sm:$0xff]
        %v822 = vld [vmem:[%s806 + $0x78] sm:$0xff]
        %v823 = vlaneseq
        %v824 = vshrl.u32 %v823, 7
        %v825 = vsub.s32 1, %v824
        %v826 = vrot.slane %v509, %v825
        %827 = vmatprep.subr.mxu0 0.0
        %828 = vmatpush1.msra.mxu0 %v807
        %829 = vmatprep.subr.mxu0 0.0
        %830 = vmatpush1.msra.mxu0 %v808
        %831 = vmatprep.subr.mxu0 0.0
        %832 = vmatpush1.msra.mxu0 %v809
        %833 = vmatprep.subr.mxu0 0.0
        %834 = vmatpush1.msra.mxu0 %v810
        %835 = vmatprep.subr.mxu0 0.0
        %836 = vmatpush1.msra.mxu0 %v811
        %837 = vmatprep.subr.mxu0 0.0
        %838 = vmatpush1.msra.mxu0 %v812
        %839 = vmatprep.subr.mxu0 0.0
        %840 = vmatpush1.msra.mxu0 %v813
        %841 = vmatprep.subr.mxu0 0.0
        %842 = vmatpush1.msra.mxu0 %v814
        %843 = vmatprep.subr.mxu0 0.0
        %844 = vmatpush1.msra.mxu0 %v815
        %845 = vmatprep.subr.mxu0 0.0
        %846 = vmatpush1.msra.mxu0 %v816
        %847 = vmatprep.subr.mxu0 0.0
        %848 = vmatpush1.msra.mxu0 %v817
        %849 = vmatprep.subr.mxu0 0.0
        %850 = vmatpush1.msra.mxu0 %v818
        %851 = vmatprep.subr.mxu0 0.0
        %852 = vmatpush1.msra.mxu0 %v819
        %853 = vmatprep.subr.mxu0 0.0
        %854 = vmatpush1.msra.mxu0 %v820
        %855 = vmatprep.subr.mxu0 0.0
        %856 = vmatpush1.msra.mxu0 %v821
        %857 = vmatprep.subr.mxu0 0.0
        %858 = vmatpush1.msra.mxu0 %v822
        %859 = vmatprep.subr.mxu0 0.0
        %860 = vmatpush1.msra.mxu0 0.0
        %861 = vmatprep.subr.mxu0 0.0
        %862 = vmatpush1.msra.mxu0 0.0
        %863 = vmatprep.subr.mxu0 0.0
        %864 = vmatpush1.msra.mxu0 0.0
        %865 = vmatprep.subr.mxu0 0.0
        %866 = vmatpush1.msra.mxu0 0.0
        %867 = vmatprep.subr.mxu0 0.0
        %868 = vmatpush1.msra.mxu0 0.0
        %869 = vmatprep.subr.mxu0 0.0
        %870 = vmatpush1.msra.mxu0 0.0
        %871 = vmatprep.subr.mxu0 0.0
        %872 = vmatpush1.msra.mxu0 0.0
        %873 = vmatprep.subr.mxu0 0.0
        %874 = vmatpush1.msra.mxu0 0.0
        %875 = vmatprep.subr.mxu0 0.0
        %876 = vmatpush1.msra.mxu0 0.0
        %877 = vmatprep.subr.mxu0 0.0
        %878 = vmatpush1.msra.mxu0 0.0
        %879 = vmatprep.subr.mxu0 0.0
        %880 = vmatpush1.msra.mxu0 0.0
        %881 = vmatprep.subr.mxu0 0.0
        %882 = vmatpush1.msra.mxu0 0.0
        %883 = vmatprep.subr.mxu0 0.0
        %884 = vmatpush1.msra.mxu0 0.0
        %885 = vmatprep.subr.mxu0 0.0
        %886 = vmatpush1.msra.mxu0 0.0
        %887 = vmatprep.subr.mxu0 0.0
        %888 = vmatpush1.msra.mxu0 0.0
        %889 = vmatprep.subr.mxu0 0.0
        %890 = vmatpush1.msra.mxu0 0.0
        %891 = vmatprep.mubr.f32.mxu0 0.0
        %892 = vmatmul.mubr.f32.gmra.mrb[0].mxu0 %v707
        %v893 = vpop.f32.mrb[0].mxu0
        %v894 = vadd.f32 %v826, %v893
        %v895 = vpop.f32.mrb[0].mxu0
        %896 = vmatprep.mubr.f32.mxu0 0.0
        %897 = vmatmul.mubr.f32.gmra.mrb[0].mxu0 %v708
        %v898 = vpop.f32.mrb[0].mxu0
        %v899 = vadd.f32 %v826, %v898
        %v900 = vpop.f32.mrb[0].mxu0
        %901 = vdwg.mxu0
        %v902 = vmax.f32 %v894, 0.0
        %v903 = vmax.f32 %v899, 0.0
        %v904 = vld [vmem:[%s410] sm:$0xff]
        %v905 = vld [vmem:[%s410 + $0x8] sm:$0xff]
        %v906 = vld [vmem:[%s410 + $0x10] sm:$0xff]
        %v907 = vld [vmem:[%s410 + $0x18] sm:$0xff]
        %v908 = vld [vmem:[%s410 + $0x20] sm:$0xff]
        %v909 = vld [vmem:[%s410 + $0x28] sm:$0xff]
        %v910 = vld [vmem:[%s410 + $0x30] sm:$0xff]
        %v911 = vld [vmem:[%s410 + $0x38] sm:$0xff]
        %v912 = vld [vmem:[%s410 + $0x40] sm:$0xff]
        %v913 = vld [vmem:[%s410 + $0x48] sm:$0xff]
        %v914 = vld [vmem:[%s410 + $0x50] sm:$0xff]
        %v915 = vld [vmem:[%s410 + $0x58] sm:$0xff]
        %v916 = vld [vmem:[%s410 + $0x60] sm:$0xff]
        %v917 = vld [vmem:[%s410 + $0x68] sm:$0xff]
        %v918 = vld [vmem:[%s410 + $0x70] sm:$0xff]
        %v919 = vld [vmem:[%s410 + $0x78] sm:$0xff]
        %s920 = scalar_lea.vmem %s410, 128 [#allocation5]
        %v921 = vld [vmem:[%s920] sm:$0xff]
        %v922 = vld [vmem:[%s920 + $0x8] sm:$0xff]
        %v923 = vld [vmem:[%s920 + $0x10] sm:$0xff]
        %v924 = vld [vmem:[%s920 + $0x18] sm:$0xff]
        %v925 = vld [vmem:[%s920 + $0x20] sm:$0xff]
        %v926 = vld [vmem:[%s920 + $0x28] sm:$0xff]
        %v927 = vld [vmem:[%s920 + $0x30] sm:$0xff]
        %v928 = vld [vmem:[%s920 + $0x38] sm:$0xff]
        %v929 = vld [vmem:[%s920 + $0x40] sm:$0xff]
        %v930 = vld [vmem:[%s920 + $0x48] sm:$0xff]
        %v931 = vld [vmem:[%s920 + $0x50] sm:$0xff]
        %v932 = vld [vmem:[%s920 + $0x58] sm:$0xff]
        %v933 = vld [vmem:[%s920 + $0x60] sm:$0xff]
        %v934 = vld [vmem:[%s920 + $0x68] sm:$0xff]
        %v935 = vld [vmem:[%s920 + $0x70] sm:$0xff]
        %v936 = vld [vmem:[%s920 + $0x78] sm:$0xff]
        %937 = vmatprep.subr.mxu0 0.0
        %938 = vmatpush1.msra.mxu0 %v921
        %939 = vmatprep.subr.mxu0 0.0
        %940 = vmatpush1.msra.mxu0 %v922
        %941 = vmatprep.subr.mxu0 0.0
        %942 = vmatpush1.msra.mxu0 %v923
        %943 = vmatprep.subr.mxu0 0.0
        %944 = vmatpush1.msra.mxu0 %v924
        %945 = vmatprep.subr.mxu0 0.0
        %946 = vmatpush1.msra.mxu0 %v925
        %947 = vmatprep.subr.mxu0 0.0
        %948 = vmatpush1.msra.mxu0 %v926
        %949 = vmatprep.subr.mxu0 0.0
        %950 = vmatpush1.msra.mxu0 %v927
        %951 = vmatprep.subr.mxu0 0.0
        %952 = vmatpush1.msra.mxu0 %v928
        %953 = vmatprep.subr.mxu0 0.0
        %954 = vmatpush1.msra.mxu0 %v929
        %955 = vmatprep.subr.mxu0 0.0
        %956 = vmatpush1.msra.mxu0 %v930
        %957 = vmatprep.subr.mxu0 0.0
        %958 = vmatpush1.msra.mxu0 %v931
        %959 = vmatprep.subr.mxu0 0.0
        %960 = vmatpush1.msra.mxu0 %v932
        %961 = vmatprep.subr.mxu0 0.0
        %962 = vmatpush1.msra.mxu0 %v933
        %963 = vmatprep.subr.mxu0 0.0
        %964 = vmatpush1.msra.mxu0 %v934
        %965 = vmatprep.subr.mxu0 0.0
        %966 = vmatpush1.msra.mxu0 %v935
        %967 = vmatprep.subr.mxu0 0.0
        %968 = vmatpush1.msra.mxu0 %v936
        %969 = vmatprep.subr.mxu0 0.0
        %970 = vmatpush1.msra.mxu0 0.0
        %971 = vmatprep.subr.mxu0 0.0
        %972 = vmatpush1.msra.mxu0 0.0
        %973 = vmatprep.subr.mxu0 0.0
        %974 = vmatpush1.msra.mxu0 0.0
        %975 = vmatprep.subr.mxu0 0.0
        %976 = vmatpush1.msra.mxu0 0.0
        %977 = vmatprep.subr.mxu0 0.0
        %978 = vmatpush1.msra.mxu0 0.0
        %979 = vmatprep.subr.mxu0 0.0
        %980 = vmatpush1.msra.mxu0 0.0
        %981 = vmatprep.subr.mxu0 0.0
        %982 = vmatpush1.msra.mxu0 0.0
        %983 = vmatprep.subr.mxu0 0.0
        %984 = vmatpush1.msra.mxu0 0.0
        %985 = vmatprep.subr.mxu0 0.0
        %986 = vmatpush1.msra.mxu0 0.0
        %987 = vmatprep.subr.mxu0 0.0
        %988 = vmatpush1.msra.mxu0 0.0
        %989 = vmatprep.subr.mxu0 0.0
        %990 = vmatpush1.msra.mxu0 0.0
        %991 = vmatprep.subr.mxu0 0.0
        %992 = vmatpush1.msra.mxu0 0.0
        %993 = vmatprep.subr.mxu0 0.0
        %994 = vmatpush1.msra.mxu0 0.0
        %995 = vmatprep.subr.mxu0 0.0
        %996 = vmatpush1.msra.mxu0 0.0
        %997 = vmatprep.subr.mxu0 0.0
        %998 = vmatpush1.msra.mxu0 0.0
        %999 = vmatprep.subr.mxu0 0.0
        %1000 = vmatpush1.msra.mxu0 0.0
        %1001 = vmatprep.mubr.f32.mxu0 0.0
        %1002 = vmatmul.mubr.f32.gmra.mrb[0].mxu0 %v804
        %v1003 = vpop.f32.mrb[0].mxu0
        %v1004 = vadd.f32 0.0, %v1003
        %v1005 = vpop.f32.mrb[0].mxu0
        %1006 = vmatprep.mubr.f32.mxu0 0.0
        %1007 = vmatmul.mubr.f32.gmra.mrb[0].mxu0 %v805
        %v1008 = vpop.f32.mrb[0].mxu0
        %v1009 = vadd.f32 0.0, %v1008
        %v1010 = vpop.f32.mrb[0].mxu0
        %1011 = vdwg.mxu0
        %1012 = vmatprep.subr.mxu0 0.0
        %1013 = vmatpush1.msra.mxu0 %v904
        %1014 = vmatprep.subr.mxu0 0.0
        %1015 = vmatpush1.msra.mxu0 %v905
        %1016 = vmatprep.subr.mxu0 0.0
        %1017 = vmatpush1.msra.mxu0 %v906
        %1018 = vmatprep.subr.mxu0 0.0
        %1019 = vmatpush1.msra.mxu0 %v907
        %1020 = vmatprep.subr.mxu0 0.0
        %1021 = vmatpush1.msra.mxu0 %v908
        %1022 = vmatprep.subr.mxu0 0.0
        %1023 = vmatpush1.msra.mxu0 %v909
        %1024 = vmatprep.subr.mxu0 0.0
        %1025 = vmatpush1.msra.mxu0 %v910
        %1026 = vmatprep.subr.mxu0 0.0
        %1027 = vmatpush1.msra.mxu0 %v911
        %1028 = vmatprep.subr.mxu0 0.0
        %1029 = vmatpush1.msra.mxu0 %v912
        %1030 = vmatprep.subr.mxu0 0.0
        %1031 = vmatpush1.msra.mxu0 %v913
        %1032 = vmatprep.subr.mxu0 0.0
        %1033 = vmatpush1.msra.mxu0 %v914
        %1034 = vmatprep.subr.mxu0 0.0
        %1035 = vmatpush1.msra.mxu0 %v915
        %1036 = vmatprep.subr.mxu0 0.0
        %1037 = vmatpush1.msra.mxu0 %v916
        %1038 = vmatprep.subr.mxu0 0.0
        %1039 = vmatpush1.msra.mxu0 %v917
        %1040 = vmatprep.subr.mxu0 0.0
        %1041 = vmatpush1.msra.mxu0 %v918
        %1042 = vmatprep.subr.mxu0 0.0
        %1043 = vmatpush1.msra.mxu0 %v919
        %1044 = vmatprep.subr.mxu0 0.0
        %1045 = vmatpush1.msra.mxu0 0.0
        %1046 = vmatprep.subr.mxu0 0.0
        %1047 = vmatpush1.msra.mxu0 0.0
        %1048 = vmatprep.subr.mxu0 0.0
        %1049 = vmatpush1.msra.mxu0 0.0
        %1050 = vmatprep.subr.mxu0 0.0
        %1051 = vmatpush1.msra.mxu0 0.0
        %1052 = vmatprep.subr.mxu0 0.0
        %1053 = vmatpush1.msra.mxu0 0.0
        %1054 = vmatprep.subr.mxu0 0.0
        %1055 = vmatpush1.msra.mxu0 0.0
        %1056 = vmatprep.subr.mxu0 0.0
        %1057 = vmatpush1.msra.mxu0 0.0
        %1058 = vmatprep.subr.mxu0 0.0
        %1059 = vmatpush1.msra.mxu0 0.0
        %1060 = vmatprep.subr.mxu0 0.0
        %1061 = vmatpush1.msra.mxu0 0.0
        %1062 = vmatprep.subr.mxu0 0.0
        %1063 = vmatpush1.msra.mxu0 0.0
        %1064 = vmatprep.subr.mxu0 0.0
        %1065 = vmatpush1.msra.mxu0 0.0
        %1066 = vmatprep.subr.mxu0 0.0
        %1067 = vmatpush1.msra.mxu0 0.0
        %1068 = vmatprep.subr.mxu0 0.0
        %1069 = vmatpush1.msra.mxu0 0.0
        %1070 = vmatprep.subr.mxu0 0.0
        %1071 = vmatpush1.msra.mxu0 0.0
        %1072 = vmatprep.subr.mxu0 0.0
        %1073 = vmatpush1.msra.mxu0 0.0
        %1074 = vmatprep.subr.mxu0 0.0
        %1075 = vmatpush1.msra.mxu0 0.0
        %1076 = vmatprep.mubr.f32.mxu0 0.0
        %1077 = vmatmul.mubr.f32.gmra.mrb[0].mxu0 %v902
        %v1078 = vpop.f32.mrb[0].mxu0
        %v1079 = vadd.f32 %v1004, %v1078
        %v1080 = vpop.f32.mrb[0].mxu0
        %1081 = vmatprep.mubr.f32.mxu0 0.0
        %1082 = vmatmul.mubr.f32.gmra.mrb[0].mxu0 %v903
        %v1083 = vpop.f32.mrb[0].mxu0
        %v1084 = vadd.f32 %v1009, %v1083
        %v1085 = vpop.f32.mrb[0].mxu0
        %1086 = vdwg.mxu0
        %v1087 = vlaneseq
        %v1088 = vshrl.u32 %v1087, 7
        %v1089 = vsub.s32 6, %v1088
        %v1090 = vrot.slane %v508, %v1089
        %v1091 = vadd.f32 %v1079, %v1090
        %v1092 = vadd.f32 %v1084, %v1090
        %v1093 = vmax.f32 %v1091, 0.0
        %v1094 = vmax.f32 %v1092, 0.0
        %v1095 = vld [vmem:[%s419] sm:$0xff]
        %v1096 = vld [vmem:[%s419 + $0x8] sm:$0xff]
        %v1097 = vld [vmem:[%s419 + $0x10] sm:$0xff]
        %v1098 = vld [vmem:[%s419 + $0x18] sm:$0xff]
        %v1099 = vld [vmem:[%s419 + $0x20] sm:$0xff]
        %v1100 = vld [vmem:[%s419 + $0x28] sm:$0xff]
        %v1101 = vld [vmem:[%s419 + $0x30] sm:$0xff]
        %v1102 = vld [vmem:[%s419 + $0x38] sm:$0xff]
        %v1103 = vld [vmem:[%s419 + $0x40] sm:$0xff]
        %v1104 = vld [vmem:[%s419 + $0x48] sm:$0xff]
        %v1105 = vld [vmem:[%s419 + $0x50] sm:$0xff]
        %v1106 = vld [vmem:[%s419 + $0x58] sm:$0xff]
        %v1107 = vld [vmem:[%s419 + $0x60] sm:$0xff]
        %v1108 = vld [vmem:[%s419 + $0x68] sm:$0xff]
        %v1109 = vld [vmem:[%s419 + $0x70] sm:$0xff]
        %v1110 = vld [vmem:[%s419 + $0x78] sm:$0xff]
        %v1111 = vld [vmem:[%s504] sm:$0x1]
        %v1113 = vlaneseq
        %v1114 = vshrl.u32 %v1113, 7
        %v1115 = vsub.s32 0, %v1114
        %v1116 = vrot.slane %v1111, %v1115
        %1118 = vmatprep.subr.mxu0 0.0
        %1119 = vmatpush1.msra.mxu0 %v1095
        %1120 = vmatprep.subr.mxu0 0.0
        %1121 = vmatpush1.msra.mxu0 %v1096
        %1122 = vmatprep.subr.mxu0 0.0
        %1123 = vmatpush1.msra.mxu0 %v1097
        %1124 = vmatprep.subr.mxu0 0.0
        %1125 = vmatpush1.msra.mxu0 %v1098
        %1126 = vmatprep.subr.mxu0 0.0
        %1127 = vmatpush1.msra.mxu0 %v1099
        %1128 = vmatprep.subr.mxu0 0.0
        %1129 = vmatpush1.msra.mxu0 %v1100
        %1130 = vmatprep.subr.mxu0 0.0
        %1131 = vmatpush1.msra.mxu0 %v1101
        %1132 = vmatprep.subr.mxu0 0.0
        %1133 = vmatpush1.msra.mxu0 %v1102
        %1134 = vmatprep.subr.mxu0 0.0
        %1135 = vmatpush1.msra.mxu0 %v1103
        %1136 = vmatprep.subr.mxu0 0.0
        %1137 = vmatpush1.msra.mxu0 %v1104
        %1138 = vmatprep.subr.mxu0 0.0
        %1139 = vmatpush1.msra.mxu0 %v1105
        %1140 = vmatprep.subr.mxu0 0.0
        %1141 = vmatpush1.msra.mxu0 %v1106
        %1142 = vmatprep.subr.mxu0 0.0
        %1143 = vmatpush1.msra.mxu0 %v1107
        %1144 = vmatprep.subr.mxu0 0.0
        %1145 = vmatpush1.msra.mxu0 %v1108
        %1146 = vmatprep.subr.mxu0 0.0
        %1147 = vmatpush1.msra.mxu0 %v1109
        %1148 = vmatprep.subr.mxu0 0.0
        %1149 = vmatpush1.msra.mxu0 %v1110
        %1150 = vmatprep.subr.mxu0 0.0
        %1151 = vmatpush1.msra.mxu0 0.0
        %1152 = vmatprep.subr.mxu0 0.0
        %1153 = vmatpush1.msra.mxu0 0.0
        %1154 = vmatprep.subr.mxu0 0.0
        %1155 = vmatpush1.msra.mxu0 0.0
        %1156 = vmatprep.subr.mxu0 0.0
        %1157 = vmatpush1.msra.mxu0 0.0
        %1158 = vmatprep.subr.mxu0 0.0
        %1159 = vmatpush1.msra.mxu0 0.0
        %1160 = vmatprep.subr.mxu0 0.0
        %1161 = vmatpush1.msra.mxu0 0.0
        %1162 = vmatprep.subr.mxu0 0.0
        %1163 = vmatpush1.msra.mxu0 0.0
        %1164 = vmatprep.subr.mxu0 0.0
        %1165 = vmatpush1.msra.mxu0 0.0
        %1166 = vmatprep.subr.mxu0 0.0
        %1167 = vmatpush1.msra.mxu0 0.0
        %1168 = vmatprep.subr.mxu0 0.0
        %1169 = vmatpush1.msra.mxu0 0.0
        %1170 = vmatprep.subr.mxu0 0.0
        %1171 = vmatpush1.msra.mxu0 0.0
        %1172 = vmatprep.subr.mxu0 0.0
        %1173 = vmatpush1.msra.mxu0 0.0
        %1174 = vmatprep.subr.mxu0 0.0
        %1175 = vmatpush1.msra.mxu0 0.0
        %1176 = vmatprep.subr.mxu0 0.0
        %1177 = vmatpush1.msra.mxu0 0.0
        %1178 = vmatprep.subr.mxu0 0.0
        %1179 = vmatpush1.msra.mxu0 0.0
        %1180 = vmatprep.subr.mxu0 0.0
        %1181 = vmatpush1.msra.mxu0 0.0
        %1182 = vmatprep.mubr.f32.mxu0 0.0
        %1183 = vmatmul.mubr.f32.gmra.mrb[0].mxu0 %v1093
        %v1184 = vpop.f32.mrb[0].mxu0
        %v1185 = vadd.f32 %v1116, %v1184
        %v1186 = vpop.f32.mrb[0].mxu0
        %1187 = vmatprep.mubr.f32.mxu0 0.0
        %1188 = vmatmul.mubr.f32.gmra.mrb[0].mxu0 %v1094
        %v1189 = vpop.f32.mrb[0].mxu0
        %v1190 = vadd.f32 %v1116, %v1189
        %v1191 = vpop.f32.mrb[0].mxu0
        %1192 = vdwg.mxu0
        %1193 = vst [vmem:[%s482] sm:$0xff] %v1185
        %1194 = vst [vmem:[%s482 + $0x8] sm:$0xff] %v1190
        %s1195 = sand.u32 %s258, 1
        %s1196 = scalar_lea.sflag [#allocation4], %s1195
        %s1197 = sand.u32 %s258, 1
        %s1198 = smul.addr %s1197, 16
        %s1199 = scalar_lea.vmem [#allocation8], %s1198
        // Predicated region
        $region65: #{tpu_custom_call.1} parent=51 // pred_check
          %p1200 = pneg %p268
        $region66: #{tpu_custom_call.1} parent=51 // pred_check_branch
          %1202 = sbr.rel (%p1200) target = $region68
        $region67: #{tpu_custom_call.1} parent=51 // pred_region
          %s1203 = smul.u32 2, %s33
          %s1205 = ssub.s32 256, 256
          %1206 = vsyncadd %s1196, %s1205
          %s1207 = smul.addr %s32, 2
          %s1208 = sadd.s32 %s1203, %s1207
          %s1209 = smul.addr %s1208, 128
          %s1210 = scalar_lea.hbm %s8, %s1209
          %s1211 = sshll.u32 %s1199, 4
          %s1212 = int_to_ptr.vmem [resolvable:$true] %s1211
          %1217 = dma.vmem_to_hbm [thread:$0]  %s1212, 256, %s1210, %s1196, 128, 128, 8
        $region68: #{tpu_custom_call.1} parent=51 // pred_fallthru
          _
      $region52: #{tpu_custom_call.1} parent=5 // pred_fallthru
        _
      %p1218 = scmp.le.s32.totalorder 2, %s23
      // Predicated region
      $region69: #{tpu_custom_call.1} parent=5 // pred_check
        %p1219 = pneg %p1218
      $region70: #{tpu_custom_call.1} parent=5 // pred_check_branch
        %1221 = sbr.rel (%p1219) target = $region72
      $region71: #{tpu_custom_call.1} parent=5 // pred_region
        %s1222 = ssub.s32 %s23, 2
        // Predicated region
        $region73: #{tpu_custom_call.1} parent=71 // pred_check
          %p1223 = pneg %p274
        $region74: #{tpu_custom_call.1} parent=71 // pred_check_branch
          %1225 = sbr.rel (%p1223) target = $region76
        $region75: #{tpu_custom_call.1} parent=71 // pred_region
          %s1226 = sand.u32 %s259, 1
          %s1227 = scalar_lea.sflag [#allocation4], %s1226
          %s1228 = sand.u32 %s259, 1
          %s1229 = smul.addr %s1228, 16
          %s1230 = scalar_lea.vmem [#allocation8], %s1229
          %1231 = dma.done %s1227, 256
        $region76: #{tpu_custom_call.1} parent=71 // pred_fallthru
          _
      $region72: #{tpu_custom_call.1} parent=5 // pred_fallthru
        _
    $region6: #{tpu_custom_call.1} parent=1 // loop_footer
      %s27 = sadd.s32 1, %s23
    $region7: #{tpu_custom_call.1} parent=1 // loop_footer_branch
      %22 = sbr.rel target = $region3
    $region8: #{tpu_custom_call.1} parent=1 // loop_exit
      _
    %1232 = vsyncpa [#allocation3], 1
    %s1233 = scalar_lea.sflag [#allocation3], 1
    %1234 = vsyncpa %s1233, 1
    %1235 = vsyncpa [#allocation6], 1
    %s1236 = scalar_lea.sflag [#allocation6], 1
    %1237 = vsyncpa %s1236, 1
    %1238 = vsyncpa [#allocation4], 1
    %s1239 = scalar_lea.sflag [#allocation4], 1
    %1240 = vsyncpa %s1239, 1

</llo_original>
